<compile_context>
chip_gen: v6e
topology: v6e:2x2x1
jax: 0.10.0
libtpu: 0.0.40
codegen_flags: <defaults>
</compile_context>

<pallas_src>
import functools

import jax
import jax.numpy as jnp
from jax import lax
from jax.experimental import pallas as pl
from jax.experimental.pallas import tpu as pltpu


def _cdiv(a, b):
    return -(-a // b)


@functools.lru_cache(maxsize=1)
def _vmem_limit_bytes():
    """Generation-aware scoped-VMEM limit (v7x: ~40 MiB, v5e/v6e: ~80 MiB)."""
    try:
        cap = int(getattr(pltpu.get_tpu_info(), "vmem_capacity_bytes", 64 << 20))
    except Exception:
        return 32 << 20
    return max(32 << 20, min(cap * 5 // 8, 96 << 20))


def fold_bn_into_conv(w_oihw, gamma, beta, running_mean, running_var, eps=1e-5):
    """Fold eval-mode BatchNorm into conv weights. Returns (w_hwio bf16, bias (1,Cout) f32)."""
    f32 = jnp.float32
    inv_std = lax.rsqrt(running_var.astype(f32) + eps)
    scale = gamma.astype(f32) * inv_std
    bias = (beta.astype(f32) - running_mean.astype(f32) * scale)[None, :]
    w_hwio = jnp.transpose(w_oihw.astype(f32), (2, 3, 1, 0)) * scale[None, None, None, :]
    return w_hwio.astype(jnp.bfloat16), bias


def _conv_bn_relu_nhwc_impl(x_nhwc, w_hwio, bias, *, stride=1, apply_relu=True,
                            tile_rows=None):
    """y = [ReLU](conv(x, w, pad=(k-1)//2, stride) + bias), NHWC bf16 in / bf16 out."""
    N, Hin, Win, Cin = x_nhwc.shape
    k, k2, Cin_w, Cout = w_hwio.shape
    assert k == k2 and Cin_w == Cin and k % 2 == 1 and stride in (1, 2)

    pad = (k - 1) // 2
    Hp, Wp = Hin + 2 * pad, Win + 2 * pad
    Ho = (Hp - k) // stride + 1
    Wo = (Wp - k) // stride + 1

    # ---- row tiling: target M = tHo*Wo >= 512, cdiv grid, masked last tile ----
    if tile_rows is None:
        tHo = max(1, min(Ho, _cdiv(512, max(1, Wo))))
    else:
        tHo = max(1, min(Ho, int(tile_rows)))
    nH = _cdiv(Ho, tHo)
    M = tHo * Wo

    x_b = x_nhwc.astype(jnp.bfloat16)

    # ---- host-side layout: pad (and de-interleave for stride 2) ----
    if stride == 1:
        # Pad H far enough that the last (possibly partial) tile's window reads
        # stay in bounds; the out-of-range output rows are masked by Pallas.
        Hp_ext = max(Hp, nH * tHo - 1 + k)
        x_pre = jnp.pad(x_b, ((0, 0), (pad, Hp_ext - Hin - pad), (pad, pad), (0, 0)))
        x_spec = pl.BlockSpec((None, Hp_ext, Wp, Cin), lambda n, t: (n, 0, 0, 0))
    else:
        # De-interleave H and W into stride phases so every in-kernel window is
        # a contiguous slice. Layout: (N, 4, Hh, Wh, Cin), phase = 2*(h%2)+(w%2).
        Hh = nH * tHo + (k - 1) // 2
        Wh = Wo + (k - 1) // 2
        x_p = jnp.pad(x_b, ((0, 0),
                            (pad, 2 * Hh - Hin - pad),
                            (pad, 2 * Wh - Win - pad),
                            (0, 0)))
        x_pre = (x_p.reshape(N, Hh, 2, Wh, 2, Cin)
                 .transpose(0, 2, 4, 1, 3, 5)
                 .reshape(N, 4, Hh, Wh, Cin))
        x_spec = pl.BlockSpec((None, 4, Hh, Wh, Cin), lambda n, t: (n, 0, 0, 0, 0))

    # Weights: (k, k*Cin, Cout) so each kh uses one merged-tap K = k*Cin matmul.
    w_arg = w_hwio.astype(jnp.bfloat16).reshape(k, k * Cin, Cout)
    b_arg = bias.reshape(1, Cout).astype(jnp.float32)

    def kernel(x_ref, w_ref, b_ref, o_ref):
        t = pl.program_id(1)
        h0 = t * tHo
        if (tHo & (tHo - 1)) == 0:          # alignment hint when it is valid
            h0 = pl.multiple_of(h0, tHo)

        def window(kh, kw):
            if stride == 1:
                return x_ref[pl.ds(h0 + kh, tHo), pl.ds(kw, Wo), :]
            phase = (kh % 2) * 2 + (kw % 2)
            return x_ref[phase, pl.ds(h0 + kh // 2, tHo), pl.ds(kw // 2, Wo), :]

        acc = None
        for kh in range(k):
            wins = [window(kh, kw) for kw in range(k)]
            patch = wins[0] if k == 1 else jnp.concatenate(wins, axis=-1)
            part = jnp.dot(patch.reshape(M, k * Cin), w_ref[kh],
                           preferred_element_type=jnp.float32)
            acc = part if acc is None else acc + part
        y = acc + b_ref[...]
        if apply_relu:
            y = jnp.maximum(y, 0.0)
        o_ref[...] = y.reshape(tHo, Wo, Cout).astype(o_ref.dtype)

    out = pl.pallas_call(
        kernel,
        out_shape=jax.ShapeDtypeStruct((N, Ho, Wo, Cout), jnp.bfloat16),
        grid_spec=pltpu.PrefetchScalarGridSpec(
            num_scalar_prefetch=0,
            grid=(N, nH),
            in_specs=[
                x_spec,
                pl.BlockSpec((k, k * Cin, Cout), lambda n, t: (0, 0, 0)),
                pl.BlockSpec((1, Cout), lambda n, t: (0, 0)),
            ],
            out_specs=pl.BlockSpec((None, tHo, Wo, Cout), lambda n, t: (n, t, 0, 0)),
        ),
        compiler_params=pltpu.CompilerParams(
            dimension_semantics=("parallel", "parallel"),
            vmem_limit_bytes=_vmem_limit_bytes(),
        ),
    )(x_pre, w_arg, b_arg)
    return out


# Backbone-facing primitive: NHWC bf16 in -> NHWC bf16 out (no layout round-trips).
conv_bn_relu_nhwc = jax.jit(_conv_bn_relu_nhwc_impl,
                            static_argnames=("stride", "apply_relu", "tile_rows"))


@functools.partial(jax.jit,
                   static_argnames=("stride", "eps", "apply_relu", "tile_rows"))
def conv_bn_relu_forward(x_nchw, w_oihw, gamma, beta, running_mean, running_var,
                         stride=1, eps=1e-5, apply_relu=True, tile_rows=None):
    """Model-boundary wrapper: NCHW f32 -> fused Conv+BN(+ReLU) -> NCHW f32."""
    w_hwio, bias = fold_bn_into_conv(w_oihw, gamma, beta, running_mean, running_var, eps)
    x = jnp.transpose(x_nchw, (0, 2, 3, 1)).astype(jnp.bfloat16)
    y = _conv_bn_relu_nhwc_impl(x, w_hwio, bias, stride=stride,
                                apply_relu=apply_relu, tile_rows=tile_rows)
    return jnp.transpose(y.astype(jnp.float32), (0, 3, 1, 2))


# ----------------------------- references ----------------------------------
def _reference_f32(x, w, gamma, beta, mean, var, stride, eps=1e-5):
    p = (w.shape[2] - 1) // 2
    xn = jnp.transpose(x, (0, 2, 3, 1)).astype(jnp.float32)
    wn = jnp.transpose(w, (2, 3, 1, 0)).astype(jnp.float32)
    conv = lax.conv_general_dilated(xn, wn, (stride, stride), ((p, p), (p, p)),
                                    dimension_numbers=("NHWC", "HWIO", "NHWC"))
    inv_std = lax.rsqrt(var + eps)
    y = jnp.maximum((conv - mean) * inv_std * gamma + beta, 0.0)
    return jnp.transpose(y, (0, 3, 1, 2))


def _reference_bf16(x, w, gamma, beta, mean, var, stride, eps=1e-5):
    """Matches kernel numerics (bf16 inputs / scale-folded bf16 weights, f32 acc)."""
    p = (w.shape[2] - 1) // 2
    inv_std = lax.rsqrt(var.astype(jnp.float32) + eps)
    scale = gamma * inv_std
    bias = beta - mean * scale
    xn = jnp.transpose(x, (0, 2, 3, 1)).astype(jnp.bfloat16).astype(jnp.float32)
    wn = (jnp.transpose(w, (2, 3, 1, 0)) * scale[None, None, None, :]
          ).astype(jnp.bfloat16).astype(jnp.float32)
    conv = lax.conv_general_dilated(xn, wn, (stride, stride), ((p, p), (p, p)),
                                    dimension_numbers=("NHWC", "HWIO", "NHWC"))
    y = jnp.maximum(conv + bias, 0.0)
    return jnp.transpose(y, (0, 3, 1, 2))


def _round_bf16(a):
    return a.astype(jnp.bfloat16).astype(jnp.float32)


def _make_case(key, N, Cin, Cout, H, W, k):
    kx, kw, kg, kb, km, kv = jax.random.split(key, 6)
    x = jax.random.normal(kx, (N, Cin, H, W), jnp.float32)
    w = jax.random.normal(kw, (Cout, Cin, k, k), jnp.float32) / jnp.sqrt(Cin * k * k)
    gamma = 1.0 + 0.1 * jax.random.normal(kg, (Cout,), jnp.float32)
    beta = 0.1 * jax.random.normal(kb, (Cout,), jnp.float32)
    mean = 0.1 * jax.random.normal(km, (Cout,), jnp.float32)
    var = jnp.abs(1.0 + 0.1 * jax.random.normal(kv, (Cout,), jnp.float32))
    return x, w, gamma, beta, mean, var


if __name__ == "__main__":
    key = jax.random.PRNGKey(0)
    keys = jax.random.split(key, 5)

    #        (name,                        key,   N, Cin, Cout,  H,  W, k, stride, tile_rows)
    cases = [
        ("3x3 stride1 (residual conv)",    keys[0], 2,   4,    8, 16, 16, 3, 1, None),
        ("3x3 stride2 (fire downsample)",  keys[1], 2,   4,    8, 16, 16, 3, 2, None),
        ("1x1 stride1 (squeeze / merge)",  keys[2], 2,   8,    8, 16, 16, 1, 1, None),
        ("3x3 stride1 c128 partial tile",  keys[3], 1, 128,  128, 16, 16, 3, 1, 6),
    ]

    for name, ck, N, Cin, Cout, H, W, k, stride, trows in cases:
        x, w, gamma, beta, mean, var = _make_case(ck, N, Cin, Cout, H, W, k)
        out = conv_bn_relu_forward(x, w, gamma, beta, mean, var,
                                   stride=stride, tile_rows=trows)
        out = jax.block_until_ready(out)

        ref_t = _round_bf16(_reference_bf16(x, w, gamma, beta, mean, var, stride))
        ref_l = _reference_f32(x, w, gamma, beta, mean, var, stride)

        p = (k - 1) // 2
        Ho = (H + 2 * p - k) // stride + 1
        Wo = (W + 2 * p - k) // stride + 1
        assert out.shape == (N, Cout, Ho, Wo), (name, out.shape)
        assert jnp.allclose(out, ref_t, atol=1e-2, rtol=1e-2), (
            name, float(jnp.max(jnp.abs(out - ref_t))))
        assert jnp.allclose(out, ref_l, atol=1e-1, rtol=1e-1), (
            name, float(jnp.max(jnp.abs(out - ref_l))))

    # Chained NHWC/bf16 usage (how a backbone composes this primitive): only the
    # model boundary converts layout/dtype.
    x, w1, g1, b1, m1, v1 = _make_case(keys[4], 2, 4, 8, 16, 16, 3)
    _, w2, g2, b2, m2, v2 = _make_case(jax.random.split(keys[4])[0], 2, 8, 8, 16, 16, 3)
    w1h, bias1 = fold_bn_into_conv(w1, g1, b1, m1, v1)
    w2h, bias2 = fold_bn_into_conv(w2, g2, b2, m2, v2)
    xh = jnp.transpose(x, (0, 2, 3, 1)).astype(jnp.bfloat16)
    y = conv_bn_relu_nhwc(xh, w1h, bias1, stride=1)
    y = conv_bn_relu_nhwc(y, w2h, bias2, stride=2)
    out2 = jax.block_until_ready(jnp.transpose(y.astype(jnp.float32), (0, 3, 1, 2)))

    ref1 = _reference_bf16(x, w1, g1, b1, m1, v1, 1)
    ref2 = _round_bf16(_reference_bf16(ref1, w2, g2, b2, m2, v2, 2))
    assert out2.shape == ref2.shape, (out2.shape, ref2.shape)
    assert jnp.allclose(out2, ref2, atol=2e-2, rtol=2e-2), float(
        jnp.max(jnp.abs(out2 - ref2)))

    print("KERNEL_OK")
</pallas_src>

<mosaic_0001>
module attributes {stable_mosaic.version = 11 : i64} {
  func.func @kernel(%arg0: i32, %arg1: i32, %arg2: memref<1x18x18x4xbf16, #tpu.memory_space<vmem>>, %arg3: memref<3x12x8xbf16, #tpu.memory_space<vmem>>, %arg4: memref<1x8xf32, #tpu.memory_space<vmem>>, %arg5: memref<1x16x16x8xbf16, #tpu.memory_space<vmem>>) attributes {dimension_semantics = [#tpu.dimension_semantics<parallel>, #tpu.dimension_semantics<parallel>], iteration_bounds = array<i64: 2, 1>, scalar_prefetch = 0 : i64, scratch_operands = 0 : i64, tpu.core_type = #tpu.core_type<tc>, window_params = [{transform_indices = @transform_0, window_bounds = array<i64: 1, 18, 18, 4>}, {pipeline_mode = #tpu.pipeline_mode<synchronous>, transform_indices = @transform_1, window_bounds = array<i64: 3, 12, 8>}, {pipeline_mode = #tpu.pipeline_mode<synchronous>, transform_indices = @transform_2, window_bounds = array<i64: 1, 8>}, {transform_indices = @transform_3, window_bounds = array<i64: 1, 16, 16, 8>}]} {
    %c16_i32 = arith.constant 16 : i32
    %0 = arith.muli %arg1, %c16_i32 : i32
    %1 = tpu.assume_multiple %0, 16 : i32
    %c0_i32 = arith.constant 0 : i32
    %2 = arith.addi %1, %c0_i32 : i32
    %c0 = arith.constant 0 : index
    %3 = arith.index_cast %2 : i32 to index
    %c0_0 = arith.constant 0 : index
    %c0_1 = arith.constant 0 : index
    %4 = vector.load %arg2[%c0, %3, %c0_0, %c0_1] : memref<1x18x18x4xbf16, #tpu.memory_space<vmem>>, vector<1x16x16x4xbf16>
    %5 = vector.shape_cast %4 : vector<1x16x16x4xbf16> to vector<16x16x4xbf16>
    %c0_i32_2 = arith.constant 0 : i32
    %6 = arith.addi %1, %c0_i32_2 : i32
    %c0_3 = arith.constant 0 : index
    %7 = arith.index_cast %6 : i32 to index
    %c1 = arith.constant 1 : index
    %c0_4 = arith.constant 0 : index
    %8 = vector.load %arg2[%c0_3, %7, %c1, %c0_4] : memref<1x18x18x4xbf16, #tpu.memory_space<vmem>>, vector<1x16x16x4xbf16>
    %9 = vector.shape_cast %8 : vector<1x16x16x4xbf16> to vector<16x16x4xbf16>
    %c0_i32_5 = arith.constant 0 : i32
    %10 = arith.addi %1, %c0_i32_5 : i32
    %c0_6 = arith.constant 0 : index
    %11 = arith.index_cast %10 : i32 to index
    %c2 = arith.constant 2 : index
    %c0_7 = arith.constant 0 : index
    %12 = vector.load %arg2[%c0_6, %11, %c2, %c0_7] : memref<1x18x18x4xbf16, #tpu.memory_space<vmem>>, vector<1x16x16x4xbf16>
    %13 = vector.shape_cast %12 : vector<1x16x16x4xbf16> to vector<16x16x4xbf16>
    %14 = tpu.concatenate %5, %9, %13 in 2 : vector<16x16x4xbf16>, vector<16x16x4xbf16>, vector<16x16x4xbf16> -> vector<16x16x12xbf16>
    %15 = vector.shape_cast %14 : vector<16x16x12xbf16> to vector<256x12xbf16>
    %c0_8 = arith.constant 0 : index
    %c0_9 = arith.constant 0 : index
    %c0_10 = arith.constant 0 : index
    %16 = vector.load %arg3[%c0_8, %c0_9, %c0_10] : memref<3x12x8xbf16, #tpu.memory_space<vmem>>, vector<1x12x8xbf16>
    %17 = vector.shape_cast %16 : vector<1x12x8xbf16> to vector<12x8xbf16>
    %cst = arith.constant dense<0.000000e+00> : vector<256x8xf32>
    %18 = tpu.matmul %15, %17, %cst {dimension_numbers = #tpu.dot_dimension_numbers<[1], [0], [0], [1], [0, 0, 1, 1], [], []>} : vector<256x12xbf16>, vector<12x8xbf16>, vector<256x8xf32> -> vector<256x8xf32>
    %c1_i32 = arith.constant 1 : i32
    %19 = arith.addi %1, %c1_i32 : i32
    %c0_11 = arith.constant 0 : index
    %20 = arith.index_cast %19 : i32 to index
    %c0_12 = arith.constant 0 : index
    %c0_13 = arith.constant 0 : index
    %21 = vector.load %arg2[%c0_11, %20, %c0_12, %c0_13] : memref<1x18x18x4xbf16, #tpu.memory_space<vmem>>, vector<1x16x16x4xbf16>
    %22 = vector.shape_cast %21 : vector<1x16x16x4xbf16> to vector<16x16x4xbf16>
    %c1_i32_14 = arith.constant 1 : i32
    %23 = arith.addi %1, %c1_i32_14 : i32
    %c0_15 = arith.constant 0 : index
    %24 = arith.index_cast %23 : i32 to index
    %c1_16 = arith.constant 1 : index
    %c0_17 = arith.constant 0 : index
    %25 = vector.load %arg2[%c0_15, %24, %c1_16, %c0_17] : memref<1x18x18x4xbf16, #tpu.memory_space<vmem>>, vector<1x16x16x4xbf16>
    %26 = vector.shape_cast %25 : vector<1x16x16x4xbf16> to vector<16x16x4xbf16>
    %c1_i32_18 = arith.constant 1 : i32
    %27 = arith.addi %1, %c1_i32_18 : i32
    %c0_19 = arith.constant 0 : index
    %28 = arith.index_cast %27 : i32 to index
    %c2_20 = arith.constant 2 : index
    %c0_21 = arith.constant 0 : index
    %29 = vector.load %arg2[%c0_19, %28, %c2_20, %c0_21] : memref<1x18x18x4xbf16, #tpu.memory_space<vmem>>, vector<1x16x16x4xbf16>
    %30 = vector.shape_cast %29 : vector<1x16x16x4xbf16> to vector<16x16x4xbf16>
    %31 = tpu.concatenate %22, %26, %30 in 2 : vector<16x16x4xbf16>, vector<16x16x4xbf16>, vector<16x16x4xbf16> -> vector<16x16x12xbf16>
    %32 = vector.shape_cast %31 : vector<16x16x12xbf16> to vector<256x12xbf16>
    %c1_22 = arith.constant 1 : index
    %c0_23 = arith.constant 0 : index
    %c0_24 = arith.constant 0 : index
    %33 = vector.load %arg3[%c1_22, %c0_23, %c0_24] : memref<3x12x8xbf16, #tpu.memory_space<vmem>>, vector<1x12x8xbf16>
    %34 = vector.shape_cast %33 : vector<1x12x8xbf16> to vector<12x8xbf16>
    %cst_25 = arith.constant dense<0.000000e+00> : vector<256x8xf32>
    %35 = tpu.matmul %32, %34, %cst_25 {dimension_numbers = #tpu.dot_dimension_numbers<[1], [0], [0], [1], [0, 0, 1, 1], [], []>} : vector<256x12xbf16>, vector<12x8xbf16>, vector<256x8xf32> -> vector<256x8xf32>
    %36 = arith.addf %18, %35 : vector<256x8xf32>
    %c2_i32 = arith.constant 2 : i32
    %37 = arith.addi %1, %c2_i32 : i32
    %c0_26 = arith.constant 0 : index
    %38 = arith.index_cast %37 : i32 to index
    %c0_27 = arith.constant 0 : index
    %c0_28 = arith.constant 0 : index
    %39 = vector.load %arg2[%c0_26, %38, %c0_27, %c0_28] : memref<1x18x18x4xbf16, #tpu.memory_space<vmem>>, vector<1x16x16x4xbf16>
    %40 = vector.shape_cast %39 : vector<1x16x16x4xbf16> to vector<16x16x4xbf16>
    %c2_i32_29 = arith.constant 2 : i32
    %41 = arith.addi %1, %c2_i32_29 : i32
    %c0_30 = arith.constant 0 : index
    %42 = arith.index_cast %41 : i32 to index
    %c1_31 = arith.constant 1 : index
    %c0_32 = arith.constant 0 : index
    %43 = vector.load %arg2[%c0_30, %42, %c1_31, %c0_32] : memref<1x18x18x4xbf16, #tpu.memory_space<vmem>>, vector<1x16x16x4xbf16>
    %44 = vector.shape_cast %43 : vector<1x16x16x4xbf16> to vector<16x16x4xbf16>
    %c2_i32_33 = arith.constant 2 : i32
    %45 = arith.addi %1, %c2_i32_33 : i32
    %c0_34 = arith.constant 0 : index
    %46 = arith.index_cast %45 : i32 to index
    %c2_35 = arith.constant 2 : index
    %c0_36 = arith.constant 0 : index
    %47 = vector.load %arg2[%c0_34, %46, %c2_35, %c0_36] : memref<1x18x18x4xbf16, #tpu.memory_space<vmem>>, vector<1x16x16x4xbf16>
    %48 = vector.shape_cast %47 : vector<1x16x16x4xbf16> to vector<16x16x4xbf16>
    %49 = tpu.concatenate %40, %44, %48 in 2 : vector<16x16x4xbf16>, vector<16x16x4xbf16>, vector<16x16x4xbf16> -> vector<16x16x12xbf16>
    %50 = vector.shape_cast %49 : vector<16x16x12xbf16> to vector<256x12xbf16>
    %c2_37 = arith.constant 2 : index
    %c0_38 = arith.constant 0 : index
    %c0_39 = arith.constant 0 : index
    %51 = vector.load %arg3[%c2_37, %c0_38, %c0_39] : memref<3x12x8xbf16, #tpu.memory_space<vmem>>, vector<1x12x8xbf16>
    %52 = vector.shape_cast %51 : vector<1x12x8xbf16> to vector<12x8xbf16>
    %cst_40 = arith.constant dense<0.000000e+00> : vector<256x8xf32>
    %53 = tpu.matmul %50, %52, %cst_40 {dimension_numbers = #tpu.dot_dimension_numbers<[1], [0], [0], [1], [0, 0, 1, 1], [], []>} : vector<256x12xbf16>, vector<12x8xbf16>, vector<256x8xf32> -> vector<256x8xf32>
    %54 = arith.addf %36, %53 : vector<256x8xf32>
    %c0_41 = arith.constant 0 : index
    %c0_42 = arith.constant 0 : index
    %55 = vector.load %arg4[%c0_41, %c0_42] : memref<1x8xf32, #tpu.memory_space<vmem>>, vector<1x8xf32>
    %56 = vector.broadcast %55 : vector<1x8xf32> to vector<256x8xf32>
    %57 = arith.addf %54, %56 : vector<256x8xf32>
    %cst_43 = arith.constant 0.000000e+00 : f32
    %58 = vector.broadcast %cst_43 : f32 to vector<256x8xf32>
    %59 = arith.maximumf %57, %58 : vector<256x8xf32>
    %60 = vector.shape_cast %59 : vector<256x8xf32> to vector<16x16x8xf32>
    %61 = arith.truncf %60 : vector<16x16x8xf32> to vector<16x16x8xbf16>
    %c0_44 = arith.constant 0 : index
    %c0_45 = arith.constant 0 : index
    %c0_46 = arith.constant 0 : index
    %c0_47 = arith.constant 0 : index
    %62 = vector.load %arg5[%c0_44, %c0_45, %c0_46, %c0_47] : memref<1x16x16x8xbf16, #tpu.memory_space<vmem>>, vector<1x16x16x8xbf16>
    %63 = vector.shape_cast %62 : vector<1x16x16x8xbf16> to vector<16x16x8xbf16>
    %64 = vector.shape_cast %61 : vector<16x16x8xbf16> to vector<1x16x16x8xbf16>
    tpu.vector_store %arg5[%c0_44, %c0_45, %c0_46, %c0_47], %64 {strides = array<i32>} : memref<1x16x16x8xbf16, #tpu.memory_space<vmem>>, vector<1x16x16x8xbf16>,
    return
  }
  func.func @transform_0(%arg0: i32, %arg1: i32) -> (i32, i32, i32, i32) {
    %c0_i32 = arith.constant 0 : i32
    %c0_i32_0 = arith.constant 0 : i32
    %c0_i32_1 = arith.constant 0 : i32
    %c0_i32_2 = arith.constant 0 : i32
    return %arg0, %c0_i32, %c0_i32_0, %c0_i32_1 : i32, i32, i32, i32
  }
  func.func @transform_1(%arg0: i32, %arg1: i32) -> (i32, i32, i32) {
    %c0_i32 = arith.constant 0 : i32
    %c0_i32_0 = arith.constant 0 : i32
    %c0_i32_1 = arith.constant 0 : i32
    %c0_i32_2 = arith.constant 0 : i32
    return %c0_i32, %c0_i32_0, %c0_i32_1 : i32, i32, i32
  }
  func.func @transform_2(%arg0: i32, %arg1: i32) -> (i32, i32) {
    %c0_i32 = arith.constant 0 : i32
    %c0_i32_0 = arith.constant 0 : i32
    %c0_i32_1 = arith.constant 0 : i32
    return %c0_i32, %c0_i32_0 : i32, i32
  }
  func.func @transform_3(%arg0: i32, %arg1: i32) -> (i32, i32, i32, i32) {
    %c0_i32 = arith.constant 0 : i32
    %c0_i32_0 = arith.constant 0 : i32
    %c0_i32_1 = arith.constant 0 : i32
    return %arg0, %arg1, %c0_i32, %c0_i32_0 : i32, i32, i32, i32
  }
}

</mosaic_0001>

<llo_original>
// kernel: conv_bn_relu_forward.1
$region0: #{conv_bn_relu_forward.1}
  #allocation0 [shape = 'u32[]', space=smem, size = 0x4, offset = 0x4, fixed_abs, tag = 'smem constant byte address 0x4 - core index']
  #allocation1 [shape = 'u32[144,128]{1,0:T(1,128)}', space=vmem, size = 0x12000, scoped, tag = 'internal scratch']
  %s0 = inlined_call_operand.vmem [shape: bf16[2,18,18,4], index: 0, kind: input, shape index: {}]
  %s1 = inlined_call_operand.vmem [shape: bf16[3,12,8], index: 1, kind: input, shape index: {}]
  %s2 = inlined_call_operand.vmem [shape: f32[1,8], index: 2, kind: input, shape index: {}]
  %s3 = inlined_call_operand.vmem [shape: bf16[2,16,16,8], index: 3, kind: output, shape index: {}]
  %s4 = sld [smem:[#allocation0]]
  $region45: #{conv_bn_relu_forward.1} parent=0
    _
  %s6 = ssub.s32 1, %s4
  %s7 = scalar_select 0, %s6, %s4
  loop: start=0, step=1, limit=4
  $region2: #{conv_bn_relu_forward.1} parent=0 // loop_pre_header
    _
  $region3: #{conv_bn_relu_forward.1} parent=0 // loop_header
    %s9 = sphi 0, %s13
    %p10 = scmp.ge.s32.totalorder %s9, 4
    %s16 = sphi 0, %s28
    %s17 = sphi 0, %s24
    %s18 = sphi 0, %s16
    %s19 = sphi 0, %s17
    %s20 = sphi 0, %s18
    %s21 = sphi 0, %s19
    %s31 = sphi 0, %s33
    %s34 = sphi 0, %s31
    %s35 = sphi 0, %s34
    %s51 = sphi 0, %s35
    %s55 = sphi 0, %s55
    %s57 = sphi 0, %s55
    %s58 = sphi 0, %s57
    %s72 = sphi 0, %s58
    %s76 = sphi 0, %s76
    %s78 = sphi 0, %s76
    %s79 = sphi 0, %s78
    %s93 = sphi 0, %s79
    %s101 = sphi 0, %s103
    %s104 = sphi 0, %s101
    %s105 = sphi 0, %s104
    %s121 = sphi 0, %s105
  $region4: #{conv_bn_relu_forward.1} parent=0 // loop_header_branch
    %12 = sbr.rel (%p10) target = $region8
  $region5: #{conv_bn_relu_forward.1} parent=0 // loop_body
    %s14 = ssub.s32 %s9, 1
    %s15 = ssub.s32 %s9, 2
    %s22 = sadd.s32 1, %s17
    %p23 = scmp.ge.s32.totalorder %s22, 1
    %s24 = scalar_select %p23, 0, %s22
    %s25 = sadd.s32 1, %s16
    %s26 = scalar_select %p23, %s25, %s16
    %p27 = scmp.ge.s32.totalorder %s26, 2
    %s28 = scalar_select %p27, 0, %s26
    %s29 = ssub.s32 %s16, %s28
    %p30 = scmp.eq.s32.totalorder %s29, 0
    %s32 = sadd.s32 %s31, 1
    %s33 = scalar_select %p30, %s31, %s32
    %p36 = pneg %p30
    %p37 = scmp.eq.s32.totalorder %s9, 1
    %p38 = por %p36, %p37
    %p39 = scmp.ne.s32.totalorder %s31, %s34
    %p40 = scmp.eq.s32.totalorder %s9, 0
    %p41 = por %p39, %p40
    %p42 = scmp.ne.s32.totalorder %s31, %s34
    %p43 = scmp.eq.s32.totalorder %s14, 1
    %p44 = por %p42, %p43
    %p45 = scmp.ne.s32.totalorder %s34, %s35
    %p46 = scmp.eq.s32.totalorder %s14, 0
    %p47 = por %p45, %p46
    %p48 = scmp.ne.s32.totalorder %s34, %s35
    %p49 = scmp.eq.s32.totalorder %s15, 1
    %p50 = por %p48, %p49
    %p52 = scmp.ne.s32.totalorder %s35, %s51
    %p53 = scmp.eq.s32.totalorder %s15, 0
    %p54 = por %p52, %p53
    %s56 = sadd.s32 %s55, 1
    %p59 = scmp.eq.s32.totalorder %s9, 1
    %p60 = scmp.ne.s32.totalorder %s55, %s57
    %p61 = scmp.eq.s32.totalorder %s9, 0
    %p62 = por %p60, %p61
    %p63 = scmp.ne.s32.totalorder %s55, %s57
    %p64 = scmp.eq.s32.totalorder %s14, 1
    %p65 = por %p63, %p64
    %p66 = scmp.ne.s32.totalorder %s57, %s58
    %p67 = scmp.eq.s32.totalorder %s14, 0
    %p68 = por %p66, %p67
    %p69 = scmp.ne.s32.totalorder %s57, %s58
    %p70 = scmp.eq.s32.totalorder %s15, 1
    %p71 = por %p69, %p70
    %p73 = scmp.ne.s32.totalorder %s58, %s72
    %p74 = scmp.eq.s32.totalorder %s15, 0
    %p75 = por %p73, %p74
    %s77 = sadd.s32 %s76, 1
    %p80 = scmp.eq.s32.totalorder %s9, 1
    %p81 = scmp.ne.s32.totalorder %s76, %s78
    %p82 = scmp.eq.s32.totalorder %s9, 0
    %p83 = por %p81, %p82
    %p84 = scmp.ne.s32.totalorder %s76, %s78
    %p85 = scmp.eq.s32.totalorder %s14, 1
    %p86 = por %p84, %p85
    %p87 = scmp.ne.s32.totalorder %s78, %s79
    %p88 = scmp.eq.s32.totalorder %s14, 0
    %p89 = por %p87, %p88
    %p90 = scmp.ne.s32.totalorder %s78, %s79
    %p91 = scmp.eq.s32.totalorder %s15, 1
    %p92 = por %p90, %p91
    %p94 = scmp.ne.s32.totalorder %s79, %s93
    %p95 = scmp.eq.s32.totalorder %s15, 0
    %p96 = por %p94, %p95
    %s97 = ssub.s32 %s16, %s28
    %s98 = ssub.s32 %s17, %s24
    %s99 = sor.u32 %s97, %s98
    %p100 = scmp.eq.s32.totalorder %s99, 0
    %s102 = sadd.s32 %s101, 1
    %s103 = scalar_select %p100, %s101, %s102
    %p106 = pneg %p100
    %p107 = scmp.eq.s32.totalorder %s9, 1
    %p108 = por %p106, %p107
    %p109 = scmp.ne.s32.totalorder %s101, %s104
    %p110 = scmp.eq.s32.totalorder %s9, 0
    %p111 = por %p109, %p110
    %p112 = scmp.ne.s32.totalorder %s101, %s104
    %p113 = scmp.eq.s32.totalorder %s14, 1
    %p114 = por %p112, %p113
    %p115 = scmp.ne.s32.totalorder %s104, %s105
    %p116 = scmp.eq.s32.totalorder %s14, 0
    %p117 = por %p115, %p116
    %p118 = scmp.ne.s32.totalorder %s104, %s105
    %p119 = scmp.eq.s32.totalorder %s15, 1
    %p120 = por %p118, %p119
    %p122 = scmp.ne.s32.totalorder %s105, %s121
    %p123 = scmp.eq.s32.totalorder %s15, 0
    %p124 = por %p122, %p123
    %p125 = scmp.le.s32.totalorder 1, %s9
    %p126 = scmp.lt.s32.totalorder %s9, 3
    %p127 = pnand %p125, %p126
    %p128 = pneg %p127
    // Predicated region
    $region9: #{conv_bn_relu_forward.1} parent=5 // pred_check
      _
    $region10: #{conv_bn_relu_forward.1} parent=5 // pred_check_branch
      %130 = sbr.rel (%p127) target = $region12
    $region11: #{conv_bn_relu_forward.1} parent=5 // pred_region
      %s131 = ssub.s32 %s9, 1
      // Predicated region
      $region13: #{conv_bn_relu_forward.1} parent=11 // pred_check
        %p132 = pneg %p68
      $region14: #{conv_bn_relu_forward.1} parent=11 // pred_check_branch
        %134 = sbr.rel (%p132) target = $region16
      $region15: #{conv_bn_relu_forward.1} parent=11 // pred_region
        _
      $region16: #{conv_bn_relu_forward.1} parent=11 // pred_fallthru
        _
      // Predicated region
      $region17: #{conv_bn_relu_forward.1} parent=11 // pred_check
        %p135 = pneg %p89
      $region18: #{conv_bn_relu_forward.1} parent=11 // pred_check_branch
        %137 = sbr.rel (%p135) target = $region20
      $region19: #{conv_bn_relu_forward.1} parent=11 // pred_region
        _
      $region20: #{conv_bn_relu_forward.1} parent=11 // pred_fallthru
        _
    $region12: #{conv_bn_relu_forward.1} parent=5 // pred_fallthru
      _
    %p138 = scmp.lt.s32.totalorder %s9, 2
    // Predicated region
    $region21: #{conv_bn_relu_forward.1} parent=5 // pred_check
      %p139 = pneg %p138
    $region22: #{conv_bn_relu_forward.1} parent=5 // pred_check_branch
      %141 = sbr.rel (%p139) target = $region24
    $region23: #{conv_bn_relu_forward.1} parent=5 // pred_region
      // Predicated region
      $region25: #{conv_bn_relu_forward.1} parent=23 // pred_check
        %p142 = pneg %p41
      $region26: #{conv_bn_relu_forward.1} parent=23 // pred_check_branch
        %144 = sbr.rel (%p142) target = $region28
      $region27: #{conv_bn_relu_forward.1} parent=23 // pred_region
        %p145 = scmp.lt.s32.totalorder %s16, 1
        %s146 = scalar_select %p145, %s16, 1
        %s147 = smul.addr %s146, 54
        %s148 = smul.addr %s147, 4
        %s149 = scalar_lea.vmem %s0, %s148
      $region28: #{conv_bn_relu_forward.1} parent=23 // pred_fallthru
        _
    $region24: #{conv_bn_relu_forward.1} parent=5 // pred_fallthru
      _
    %p150 = scmp.le.s32.totalorder 1, %s9
    %p151 = scmp.lt.s32.totalorder %s9, 3
    %p152 = pnand %p150, %p151
    %p153 = pneg %p152
    // Predicated region
    $region29: #{conv_bn_relu_forward.1} parent=5 // pred_check
      _
    $region30: #{conv_bn_relu_forward.1} parent=5 // pred_check_branch
      %155 = sbr.rel (%p152) target = $region32
    $region31: #{conv_bn_relu_forward.1} parent=5 // pred_region
      %s156 = ssub.s32 %s9, 1
      %p157 = scmp.lt.s32.totalorder %s18, 1
      %s158 = scalar_select %p157, %s18, 1
      %s159 = smul.addr %s158, 54
      %s160 = smul.addr %s159, 4
      %s161 = scalar_lea.vmem %s0, %s160
      %p162 = pneg %p47
      %p163 = pneg %p44
      %p164 = pneg %p68
      %p165 = pneg %p65
      %p166 = pneg %p89
      %p167 = pneg %p86
      %p168 = pneg %p117
      %p169 = pneg %p114
      %s170 = smul.u32 16, %s19
      %p171 = scmp.lt.s32.totalorder %s18, 1
      %s172 = scalar_select %p171, %s18, 1
      %p173 = scmp.lt.s32.totalorder %s170, 15
      %s174 = scalar_select %p173, %s170, 15
      %s175 = smul.addr %s174, 2
      %s176 = smul.addr %s172, 32
      %s177 = sadd.s32 %s175, %s176
      %s178 = smul.addr %s177, 4
      %s179 = scalar_lea.vmem %s3, %s178
      %p180 = scmp.lt.s32.totalorder %s18, 1
      %s181 = scalar_select %p180, %s18, 1
      %s182 = smul.addr %s181, 54
      %s183 = smul.addr %s182, 4
      %s184 = scalar_lea.vmem %s0, %s183
      %s185 = smul.u32 16, %s19
      %p186 = scmp.lt.s32.totalorder %s18, 1
      %s187 = scalar_select %p186, %s18, 1
      %p188 = scmp.lt.s32.totalorder %s185, 15
      %s189 = scalar_select %p188, %s185, 15
      %s190 = smul.addr %s189, 2
      %s191 = smul.addr %s187, 32
      %s192 = sadd.s32 %s190, %s191
      %s193 = smul.addr %s192, 4
      %s194 = scalar_lea.vmem %s3, %s193
      %s195 = smul.u32 16, %s19
      %s197 = smul.u32 %s19, 16
      %s198 = smul.u32 %s197, 3
      %s199 = smul.addr %s198, 4
      %s200 = scalar_lea.vmem %s184, %s199
      %v201 = vld [vmem:[%s200] sm:$0xf]
      %v202 = vld [vmem:[%s200 + $0x4] sm:$0xf]
      %v203 = vld [vmem:[%s200 + $0xc] sm:$0xf]
      %v204 = vld [vmem:[%s200 + $0x10] sm:$0xf]
      %v205 = vld [vmem:[%s200 + $0x18] sm:$0xf]
      %v206 = vld [vmem:[%s200 + $0x1c] sm:$0xf]
      %v207 = vld [vmem:[%s200 + $0x24] sm:$0xf]
      %v208 = vld [vmem:[%s200 + $0x28] sm:$0xf]
      %v209 = vld [vmem:[%s200 + $0x30] sm:$0xf]
      %v210 = vld [vmem:[%s200 + $0x34] sm:$0xf]
      %v211 = vld [vmem:[%s200 + $0x3c] sm:$0xf]
      %v212 = vld [vmem:[%s200 + $0x40] sm:$0xf]
      %v213 = vld [vmem:[%s200 + $0x48] sm:$0xf]
      %v214 = vld [vmem:[%s200 + $0x4c] sm:$0xf]
      %v215 = vld [vmem:[%s200 + $0x54] sm:$0xf]
      %v216 = vld [vmem:[%s200 + $0x58] sm:$0xf]
      %v217 = vld [vmem:[%s200 + $0x60] sm:$0xf]
      %v218 = vld [vmem:[%s200 + $0x64] sm:$0xf]
      %v219 = vld [vmem:[%s200 + $0x6c] sm:$0xf]
      %v220 = vld [vmem:[%s200 + $0x70] sm:$0xf]
      %v221 = vld [vmem:[%s200 + $0x78] sm:$0xf]
      %v222 = vld [vmem:[%s200 + $0x7c] sm:$0xf]
      %v223 = vld [vmem:[%s200 + $0x84] sm:$0xf]
      %v224 = vld [vmem:[%s200 + $0x88] sm:$0xf]
      %v225 = vld [vmem:[%s200 + $0x90] sm:$0xf]
      %v226 = vld [vmem:[%s200 + $0x94] sm:$0xf]
      %v227 = vld [vmem:[%s200 + $0x9c] sm:$0xf]
      %v228 = vld [vmem:[%s200 + $0xa0] sm:$0xf]
      %v229 = vld [vmem:[%s200 + $0xa8] sm:$0xf]
      %v230 = vld [vmem:[%s200 + $0xac] sm:$0xf]
      %v231 = vld [vmem:[%s200 + $0xb4] sm:$0xf]
      %v232 = vld [vmem:[%s200 + $0xb8] sm:$0xf]
      %v233 = vld [vmem:[%s200 + $0x8] sm:$0x1]
      %v234 = vld [vmem:[%s200 + $0x14] sm:$0x1]
      %v235 = vld [vmem:[%s200 + $0x20] sm:$0x1]
      %v236 = vld [vmem:[%s200 + $0x2c] sm:$0x1]
      %v237 = vld [vmem:[%s200 + $0x38] sm:$0x1]
      %v238 = vld [vmem:[%s200 + $0x44] sm:$0x1]
      %v239 = vld [vmem:[%s200 + $0x50] sm:$0x1]
      %v240 = vld [vmem:[%s200 + $0x5c] sm:$0x1]
      %v241 = vld [vmem:[%s200 + $0x68] sm:$0x1]
      %v242 = vld [vmem:[%s200 + $0x74] sm:$0x1]
      %v243 = vld [vmem:[%s200 + $0x80] sm:$0x1]
      %v244 = vld [vmem:[%s200 + $0x8c] sm:$0x1]
      %v245 = vld [vmem:[%s200 + $0x98] sm:$0x1]
      %v246 = vld [vmem:[%s200 + $0xa4] sm:$0x1]
      %v247 = vld [vmem:[%s200 + $0xb0] sm:$0x1]
      %v248 = vld [vmem:[%s200 + $0xbc] sm:$0x1]
      %v249 = vld [vmem:[%s200] sm:$0xe]
      %v250 = vld [vmem:[%s200 + $0xc] sm:$0xe]
      %v251 = vld [vmem:[%s200 + $0x18] sm:$0xe]
      %v252 = vld [vmem:[%s200 + $0x24] sm:$0xe]
      %v253 = vld [vmem:[%s200 + $0x30] sm:$0xe]
      %v254 = vld [vmem:[%s200 + $0x3c] sm:$0xe]
      %v255 = vld [vmem:[%s200 + $0x48] sm:$0xe]
      %v256 = vld [vmem:[%s200 + $0x54] sm:$0xe]
      %v257 = vld [vmem:[%s200 + $0x60] sm:$0xe]
      %v258 = vld [vmem:[%s200 + $0x6c] sm:$0xe]
      %v259 = vld [vmem:[%s200 + $0x78] sm:$0xe]
      %v260 = vld [vmem:[%s200 + $0x84] sm:$0xe]
      %v261 = vld [vmem:[%s200 + $0x90] sm:$0xe]
      %v262 = vld [vmem:[%s200 + $0x9c] sm:$0xe]
      %v263 = vld [vmem:[%s200 + $0xa8] sm:$0xe]
      %v264 = vld [vmem:[%s200 + $0xb4] sm:$0xe]
      %v297 = vunpack.c.l.b16 %v201
      %v298 = vunpack.c.l.b16 %v202
      %v299 = vunpack.c.l.b16 %v203
      %v300 = vunpack.c.l.b16 %v204
      %v301 = vunpack.c.l.b16 %v205
      %v302 = vunpack.c.l.b16 %v206
      %v303 = vunpack.c.l.b16 %v207
      %v304 = vunpack.c.l.b16 %v208
      %v305 = vunpack.c.l.b16 %v209
      %v306 = vunpack.c.l.b16 %v210
      %v307 = vunpack.c.l.b16 %v211
      %v308 = vunpack.c.l.b16 %v212
      %v309 = vunpack.c.l.b16 %v213
      %v310 = vunpack.c.l.b16 %v214
      %v311 = vunpack.c.l.b16 %v215
      %v312 = vunpack.c.l.b16 %v216
      %v313 = vunpack.c.l.b16 %v217
      %v314 = vunpack.c.l.b16 %v218
      %v315 = vunpack.c.l.b16 %v219
      %v316 = vunpack.c.l.b16 %v220
      %v317 = vunpack.c.l.b16 %v221
      %v318 = vunpack.c.l.b16 %v222
      %v319 = vunpack.c.l.b16 %v223
      %v320 = vunpack.c.l.b16 %v224
      %v321 = vunpack.c.l.b16 %v225
      %v322 = vunpack.c.l.b16 %v226
      %v323 = vunpack.c.l.b16 %v227
      %v324 = vunpack.c.l.b16 %v228
      %v325 = vunpack.c.l.b16 %v229
      %v326 = vunpack.c.l.b16 %v230
      %v327 = vunpack.c.l.b16 %v231
      %v328 = vunpack.c.l.b16 %v232
      %v329 = vpack.c.b16 %v298, %v297
      %v330 = vpack.c.b16 %v300, %v299
      %v331 = vpack.c.b16 %v302, %v301
      %v332 = vpack.c.b16 %v304, %v303
      %v333 = vpack.c.b16 %v306, %v305
      %v334 = vpack.c.b16 %v308, %v307
      %v335 = vpack.c.b16 %v310, %v309
      %v336 = vpack.c.b16 %v312, %v311
      %v337 = vpack.c.b16 %v314, %v313
      %v338 = vpack.c.b16 %v316, %v315
      %v339 = vpack.c.b16 %v318, %v317
      %v340 = vpack.c.b16 %v320, %v319
      %v341 = vpack.c.b16 %v322, %v321
      %v342 = vpack.c.b16 %v324, %v323
      %v343 = vpack.c.b16 %v326, %v325
      %v344 = vpack.c.b16 %v328, %v327
      %v361 = vunpack.c.l.b16 %v233
      %v362 = vunpack.c.l.b16 %v234
      %v363 = vunpack.c.l.b16 %v235
      %v364 = vunpack.c.l.b16 %v236
      %v365 = vunpack.c.l.b16 %v237
      %v366 = vunpack.c.l.b16 %v238
      %v367 = vunpack.c.l.b16 %v239
      %v368 = vunpack.c.l.b16 %v240
      %v369 = vunpack.c.l.b16 %v241
      %v370 = vunpack.c.l.b16 %v242
      %v371 = vunpack.c.l.b16 %v243
      %v372 = vunpack.c.l.b16 %v244
      %v373 = vunpack.c.l.b16 %v245
      %v374 = vunpack.c.l.b16 %v246
      %v375 = vunpack.c.l.b16 %v247
      %v376 = vunpack.c.l.b16 %v248
      %v377 = vpack.c.b16 %v361, %v361
      %v378 = vpack.c.b16 %v362, %v362
      %v379 = vpack.c.b16 %v363, %v363
      %v380 = vpack.c.b16 %v364, %v364
      %v381 = vpack.c.b16 %v365, %v365
      %v382 = vpack.c.b16 %v366, %v366
      %v383 = vpack.c.b16 %v367, %v367
      %v384 = vpack.c.b16 %v368, %v368
      %v385 = vpack.c.b16 %v369, %v369
      %v386 = vpack.c.b16 %v370, %v370
      %v387 = vpack.c.b16 %v371, %v371
      %v388 = vpack.c.b16 %v372, %v372
      %v389 = vpack.c.b16 %v373, %v373
      %v390 = vpack.c.b16 %v374, %v374
      %v391 = vpack.c.b16 %v375, %v375
      %v392 = vpack.c.b16 %v376, %v376
      %vm393 = vsmask.f32 7424
      %v395 = vshrl.u32 %v329, 16
      %v397 = vshll.u32 %v329, 16
      %v399 = vrot.slane %v397, 1
      %v400 = vor.u32 %v395, %v399
      %v402 = vshll.u32 %v377, 16
      %v404 = vrot.slane %v402, 1
      %v405 = vsel %vm393, %v400, %v404
      %v407 = vshrl.u32 %v330, 16
      %v409 = vshll.u32 %v330, 16
      %v411 = vrot.slane %v409, 1
      %v412 = vor.u32 %v407, %v411
      %v414 = vshll.u32 %v378, 16
      %v416 = vrot.slane %v414, 1
      %v417 = vsel %vm393, %v412, %v416
      %v419 = vshrl.u32 %v331, 16
      %v421 = vshll.u32 %v331, 16
      %v423 = vrot.slane %v421, 1
      %v424 = vor.u32 %v419, %v423
      %v426 = vshll.u32 %v379, 16
      %v428 = vrot.slane %v426, 1
      %v429 = vsel %vm393, %v424, %v428
      %v431 = vshrl.u32 %v332, 16
      %v433 = vshll.u32 %v332, 16
      %v435 = vrot.slane %v433, 1
      %v436 = vor.u32 %v431, %v435
      %v438 = vshll.u32 %v380, 16
      %v440 = vrot.slane %v438, 1
      %v441 = vsel %vm393, %v436, %v440
      %v443 = vshrl.u32 %v333, 16
      %v445 = vshll.u32 %v333, 16
      %v447 = vrot.slane %v445, 1
      %v448 = vor.u32 %v443, %v447
      %v450 = vshll.u32 %v381, 16
      %v452 = vrot.slane %v450, 1
      %v453 = vsel %vm393, %v448, %v452
      %v455 = vshrl.u32 %v334, 16
      %v457 = vshll.u32 %v334, 16
      %v459 = vrot.slane %v457, 1
      %v460 = vor.u32 %v455, %v459
      %v462 = vshll.u32 %v382, 16
      %v464 = vrot.slane %v462, 1
      %v465 = vsel %vm393, %v460, %v464
      %v467 = vshrl.u32 %v335, 16
      %v469 = vshll.u32 %v335, 16
      %v471 = vrot.slane %v469, 1
      %v472 = vor.u32 %v467, %v471
      %v474 = vshll.u32 %v383, 16
      %v476 = vrot.slane %v474, 1
      %v477 = vsel %vm393, %v472, %v476
      %v479 = vshrl.u32 %v336, 16
      %v481 = vshll.u32 %v336, 16
      %v483 = vrot.slane %v481, 1
      %v484 = vor.u32 %v479, %v483
      %v486 = vshll.u32 %v384, 16
      %v488 = vrot.slane %v486, 1
      %v489 = vsel %vm393, %v484, %v488
      %v491 = vshrl.u32 %v337, 16
      %v493 = vshll.u32 %v337, 16
      %v495 = vrot.slane %v493, 1
      %v496 = vor.u32 %v491, %v495
      %v498 = vshll.u32 %v385, 16
      %v500 = vrot.slane %v498, 1
      %v501 = vsel %vm393, %v496, %v500
      %v503 = vshrl.u32 %v338, 16
      %v505 = vshll.u32 %v338, 16
      %v507 = vrot.slane %v505, 1
      %v508 = vor.u32 %v503, %v507
      %v510 = vshll.u32 %v386, 16
      %v512 = vrot.slane %v510, 1
      %v513 = vsel %vm393, %v508, %v512
      %v515 = vshrl.u32 %v339, 16
      %v517 = vshll.u32 %v339, 16
      %v519 = vrot.slane %v517, 1
      %v520 = vor.u32 %v515, %v519
      %v522 = vshll.u32 %v387, 16
      %v524 = vrot.slane %v522, 1
      %v525 = vsel %vm393, %v520, %v524
      %v527 = vshrl.u32 %v340, 16
      %v529 = vshll.u32 %v340, 16
      %v531 = vrot.slane %v529, 1
      %v532 = vor.u32 %v527, %v531
      %v534 = vshll.u32 %v388, 16
      %v536 = vrot.slane %v534, 1
      %v537 = vsel %vm393, %v532, %v536
      %v539 = vshrl.u32 %v341, 16
      %v541 = vshll.u32 %v341, 16
      %v543 = vrot.slane %v541, 1
      %v544 = vor.u32 %v539, %v543
      %v546 = vshll.u32 %v389, 16
      %v548 = vrot.slane %v546, 1
      %v549 = vsel %vm393, %v544, %v548
      %v551 = vshrl.u32 %v342, 16
      %v553 = vshll.u32 %v342, 16
      %v555 = vrot.slane %v553, 1
      %v556 = vor.u32 %v551, %v555
      %v558 = vshll.u32 %v390, 16
      %v560 = vrot.slane %v558, 1
      %v561 = vsel %vm393, %v556, %v560
      %v563 = vshrl.u32 %v343, 16
      %v565 = vshll.u32 %v343, 16
      %v567 = vrot.slane %v565, 1
      %v568 = vor.u32 %v563, %v567
      %v570 = vshll.u32 %v391, 16
      %v572 = vrot.slane %v570, 1
      %v573 = vsel %vm393, %v568, %v572
      %v575 = vshrl.u32 %v344, 16
      %v577 = vshll.u32 %v344, 16
      %v579 = vrot.slane %v577, 1
      %v580 = vor.u32 %v575, %v579
      %v582 = vshll.u32 %v392, 16
      %v584 = vrot.slane %v582, 1
      %v585 = vsel %vm393, %v580, %v584
      %586 = vrot.lane.b32.xlu0 %v405, 4
      %v587 = vpop.permute.xlu0 %586
      %588 = vrot.lane.b32.xlu0 %v417, 4
      %v589 = vpop.permute.xlu0 %588
      %590 = vrot.lane.b32.xlu0 %v429, 4
      %v591 = vpop.permute.xlu0 %590
      %592 = vrot.lane.b32.xlu0 %v441, 4
      %v593 = vpop.permute.xlu0 %592
      %594 = vrot.lane.b32.xlu0 %v453, 4
      %v595 = vpop.permute.xlu0 %594
      %596 = vrot.lane.b32.xlu0 %v465, 4
      %v597 = vpop.permute.xlu0 %596
      %598 = vrot.lane.b32.xlu0 %v477, 4
      %v599 = vpop.permute.xlu0 %598
      %600 = vrot.lane.b32.xlu0 %v489, 4
      %v601 = vpop.permute.xlu0 %600
      %602 = vrot.lane.b32.xlu0 %v501, 4
      %v603 = vpop.permute.xlu0 %602
      %604 = vrot.lane.b32.xlu0 %v513, 4
      %v605 = vpop.permute.xlu0 %604
      %606 = vrot.lane.b32.xlu0 %v525, 4
      %v607 = vpop.permute.xlu0 %606
      %608 = vrot.lane.b32.xlu0 %v537, 4
      %v609 = vpop.permute.xlu0 %608
      %610 = vrot.lane.b32.xlu0 %v549, 4
      %v611 = vpop.permute.xlu0 %610
      %612 = vrot.lane.b32.xlu0 %v561, 4
      %v613 = vpop.permute.xlu0 %612
      %614 = vrot.lane.b32.xlu0 %v573, 4
      %v615 = vpop.permute.xlu0 %614
      %616 = vrot.lane.b32.xlu0 %v585, 4
      %v617 = vpop.permute.xlu0 %616
      %v634 = vunpack.c.l.b16 %v249
      %v635 = vunpack.c.l.b16 %v250
      %v636 = vunpack.c.l.b16 %v251
      %v637 = vunpack.c.l.b16 %v252
      %v638 = vunpack.c.l.b16 %v253
      %v639 = vunpack.c.l.b16 %v254
      %v640 = vunpack.c.l.b16 %v255
      %v641 = vunpack.c.l.b16 %v256
      %v642 = vunpack.c.l.b16 %v257
      %v643 = vunpack.c.l.b16 %v258
      %v644 = vunpack.c.l.b16 %v259
      %v645 = vunpack.c.l.b16 %v260
      %v646 = vunpack.c.l.b16 %v261
      %v647 = vunpack.c.l.b16 %v262
      %v648 = vunpack.c.l.b16 %v263
      %v649 = vunpack.c.l.b16 %v264
      %v650 = vpack.c.b16 %v298, %v634
      %v651 = vpack.c.b16 %v300, %v635
      %v652 = vpack.c.b16 %v302, %v636
      %v653 = vpack.c.b16 %v304, %v637
      %v654 = vpack.c.b16 %v306, %v638
      %v655 = vpack.c.b16 %v308, %v639
      %v656 = vpack.c.b16 %v310, %v640
      %v657 = vpack.c.b16 %v312, %v641
      %v658 = vpack.c.b16 %v314, %v642
      %v659 = vpack.c.b16 %v316, %v643
      %v660 = vpack.c.b16 %v318, %v644
      %v661 = vpack.c.b16 %v320, %v645
      %v662 = vpack.c.b16 %v322, %v646
      %v663 = vpack.c.b16 %v324, %v647
      %v664 = vpack.c.b16 %v326, %v648
      %v665 = vpack.c.b16 %v328, %v649
      %vm666 = vcmask 1046528
      %v667 = vrot.slane %v650, 1
      %v668 = vrot.slane %v377, 1
      %v669 = vsel %vm666, %v667, %v668
      %v670 = vrot.slane %v651, 1
      %v671 = vrot.slane %v378, 1
      %v672 = vsel %vm666, %v670, %v671
      %v673 = vrot.slane %v652, 1
      %v674 = vrot.slane %v379, 1
      %v675 = vsel %vm666, %v673, %v674
      %v676 = vrot.slane %v653, 1
      %v677 = vrot.slane %v380, 1
      %v678 = vsel %vm666, %v676, %v677
      %v679 = vrot.slane %v654, 1
      %v680 = vrot.slane %v381, 1
      %v681 = vsel %vm666, %v679, %v680
      %v682 = vrot.slane %v655, 1
      %v683 = vrot.slane %v382, 1
      %v684 = vsel %vm666, %v682, %v683
      %v685 = vrot.slane %v656, 1
      %v686 = vrot.slane %v383, 1
      %v687 = vsel %vm666, %v685, %v686
      %v688 = vrot.slane %v657, 1
      %v689 = vrot.slane %v384, 1
      %v690 = vsel %vm666, %v688, %v689
      %v691 = vrot.slane %v658, 1
      %v692 = vrot.slane %v385, 1
      %v693 = vsel %vm666, %v691, %v692
      %v694 = vrot.slane %v659, 1
      %v695 = vrot.slane %v386, 1
      %v696 = vsel %vm666, %v694, %v695
      %v697 = vrot.slane %v660, 1
      %v698 = vrot.slane %v387, 1
      %v699 = vsel %vm666, %v697, %v698
      %v700 = vrot.slane %v661, 1
      %v701 = vrot.slane %v388, 1
      %v702 = vsel %vm666, %v700, %v701
      %v703 = vrot.slane %v662, 1
      %v704 = vrot.slane %v389, 1
      %v705 = vsel %vm666, %v703, %v704
      %v706 = vrot.slane %v663, 1
      %v707 = vrot.slane %v390, 1
      %v708 = vsel %vm666, %v706, %v707
      %v709 = vrot.slane %v664, 1
      %v710 = vrot.slane %v391, 1
      %v711 = vsel %vm666, %v709, %v710
      %v712 = vrot.slane %v665, 1
      %v713 = vrot.slane %v392, 1
      %v714 = vsel %vm666, %v712, %v713
      %715 = vrot.lane.b32.xlu0 %v669, 8
      %v716 = vpop.permute.xlu0 %715
      %717 = vrot.lane.b32.xlu0 %v672, 8
      %v718 = vpop.permute.xlu0 %717
      %719 = vrot.lane.b32.xlu0 %v675, 8
      %v720 = vpop.permute.xlu0 %719
      %721 = vrot.lane.b32.xlu0 %v678, 8
      %v722 = vpop.permute.xlu0 %721
      %723 = vrot.lane.b32.xlu0 %v681, 8
      %v724 = vpop.permute.xlu0 %723
      %725 = vrot.lane.b32.xlu0 %v684, 8
      %v726 = vpop.permute.xlu0 %725
      %727 = vrot.lane.b32.xlu0 %v687, 8
      %v728 = vpop.permute.xlu0 %727
      %729 = vrot.lane.b32.xlu0 %v690, 8
      %v730 = vpop.permute.xlu0 %729
      %731 = vrot.lane.b32.xlu0 %v693, 8
      %v732 = vpop.permute.xlu0 %731
      %733 = vrot.lane.b32.xlu0 %v696, 8
      %v734 = vpop.permute.xlu0 %733
      %735 = vrot.lane.b32.xlu0 %v699, 8
      %v736 = vpop.permute.xlu0 %735
      %737 = vrot.lane.b32.xlu0 %v702, 8
      %v738 = vpop.permute.xlu0 %737
      %739 = vrot.lane.b32.xlu0 %v705, 8
      %v740 = vpop.permute.xlu0 %739
      %741 = vrot.lane.b32.xlu0 %v708, 8
      %v742 = vpop.permute.xlu0 %741
      %743 = vrot.lane.b32.xlu0 %v711, 8
      %v744 = vpop.permute.xlu0 %743
      %745 = vrot.lane.b32.xlu0 %v714, 8
      %v746 = vpop.permute.xlu0 %745
      %vm747 = vcmask 31744
      %v749 = vsel %vm747, %v329, %v587
      %v751 = vsel %vm747, %v330, %v589
      %v753 = vsel %vm747, %v331, %v591
      %v755 = vsel %vm747, %v332, %v593
      %v757 = vsel %vm747, %v333, %v595
      %v759 = vsel %vm747, %v334, %v597
      %v761 = vsel %vm747, %v335, %v599
      %v763 = vsel %vm747, %v336, %v601
      %v765 = vsel %vm747, %v337, %v603
      %v767 = vsel %vm747, %v338, %v605
      %v769 = vsel %vm747, %v339, %v607
      %v771 = vsel %vm747, %v340, %v609
      %v773 = vsel %vm747, %v341, %v611
      %v775 = vsel %vm747, %v342, %v613
      %v777 = vsel %vm747, %v343, %v615
      %v779 = vsel %vm747, %v344, %v617
      %vm780 = vcmask 64512
      %v782 = vsel %vm780, %v749, %v716
      %v784 = vsel %vm780, %v751, %v718
      %v786 = vsel %vm780, %v753, %v720
      %v788 = vsel %vm780, %v755, %v722
      %v790 = vsel %vm780, %v757, %v724
      %v792 = vsel %vm780, %v759, %v726
      %v794 = vsel %vm780, %v761, %v728
      %v796 = vsel %vm780, %v763, %v730
      %v798 = vsel %vm780, %v765, %v732
      %v800 = vsel %vm780, %v767, %v734
      %v802 = vsel %vm780, %v769, %v736
      %v804 = vsel %vm780, %v771, %v738
      %v806 = vsel %vm780, %v773, %v740
      %v808 = vsel %vm780, %v775, %v742
      %v810 = vsel %vm780, %v777, %v744
      %v812 = vsel %vm780, %v779, %v746
      %v813 = vld [vmem:[%s1] sm:$0xf]
      %v814 = vld [vmem:[%s1 + $0x4] sm:$0x3]
      %s815 = sadd.s32 %s197, 1
      %s816 = smul.u32 %s815, 3
      %s817 = smul.addr %s816, 4
      %s818 = scalar_lea.vmem %s184, %s817
      %v819 = vld [vmem:[%s818] sm:$0xf]
      %v820 = vld [vmem:[%s818 + $0x4] sm:$0xf]
      %v821 = vld [vmem:[%s818 + $0xc] sm:$0xf]
      %v822 = vld [vmem:[%s818 + $0x10] sm:$0xf]
      %v823 = vld [vmem:[%s818 + $0x18] sm:$0xf]
      %v824 = vld [vmem:[%s818 + $0x1c] sm:$0xf]
      %v825 = vld [vmem:[%s818 + $0x24] sm:$0xf]
      %v826 = vld [vmem:[%s818 + $0x28] sm:$0xf]
      %v827 = vld [vmem:[%s818 + $0x30] sm:$0xf]
      %v828 = vld [vmem:[%s818 + $0x34] sm:$0xf]
      %v829 = vld [vmem:[%s818 + $0x3c] sm:$0xf]
      %v830 = vld [vmem:[%s818 + $0x40] sm:$0xf]
      %v831 = vld [vmem:[%s818 + $0x48] sm:$0xf]
      %v832 = vld [vmem:[%s818 + $0x4c] sm:$0xf]
      %v833 = vld [vmem:[%s818 + $0x54] sm:$0xf]
      %v834 = vld [vmem:[%s818 + $0x58] sm:$0xf]
      %v835 = vld [vmem:[%s818 + $0x60] sm:$0xf]
      %v836 = vld [vmem:[%s818 + $0x64] sm:$0xf]
      %v837 = vld [vmem:[%s818 + $0x6c] sm:$0xf]
      %v838 = vld [vmem:[%s818 + $0x70] sm:$0xf]
      %v839 = vld [vmem:[%s818 + $0x78] sm:$0xf]
      %v840 = vld [vmem:[%s818 + $0x7c] sm:$0xf]
      %v841 = vld [vmem:[%s818 + $0x84] sm:$0xf]
      %v842 = vld [vmem:[%s818 + $0x88] sm:$0xf]
      %v843 = vld [vmem:[%s818 + $0x90] sm:$0xf]
      %v844 = vld [vmem:[%s818 + $0x94] sm:$0xf]
      %v845 = vld [vmem:[%s818 + $0x9c] sm:$0xf]
      %v846 = vld [vmem:[%s818 + $0xa0] sm:$0xf]
      %v847 = vld [vmem:[%s818 + $0xa8] sm:$0xf]
      %v848 = vld [vmem:[%s818 + $0xac] sm:$0xf]
      %v849 = vld [vmem:[%s818 + $0xb4] sm:$0xf]
      %v850 = vld [vmem:[%s818 + $0xb8] sm:$0xf]
      %v851 = vld [vmem:[%s818 + $0x8] sm:$0x1]
      %v852 = vld [vmem:[%s818 + $0x14] sm:$0x1]
      %v853 = vld [vmem:[%s818 + $0x20] sm:$0x1]
      %v854 = vld [vmem:[%s818 + $0x2c] sm:$0x1]
      %v855 = vld [vmem:[%s818 + $0x38] sm:$0x1]
      %v856 = vld [vmem:[%s818 + $0x44] sm:$0x1]
      %v857 = vld [vmem:[%s818 + $0x50] sm:$0x1]
      %v858 = vld [vmem:[%s818 + $0x5c] sm:$0x1]
      %v859 = vld [vmem:[%s818 + $0x68] sm:$0x1]
      %v860 = vld [vmem:[%s818 + $0x74] sm:$0x1]
      %v861 = vld [vmem:[%s818 + $0x80] sm:$0x1]
      %v862 = vld [vmem:[%s818 + $0x8c] sm:$0x1]
      %v863 = vld [vmem:[%s818 + $0x98] sm:$0x1]
      %v864 = vld [vmem:[%s818 + $0xa4] sm:$0x1]
      %v865 = vld [vmem:[%s818 + $0xb0] sm:$0x1]
      %v866 = vld [vmem:[%s818 + $0xbc] sm:$0x1]
      %v867 = vld [vmem:[%s818] sm:$0xe]
      %v868 = vld [vmem:[%s818 + $0xc] sm:$0xe]
      %v869 = vld [vmem:[%s818 + $0x18] sm:$0xe]
      %v870 = vld [vmem:[%s818 + $0x24] sm:$0xe]
      %v871 = vld [vmem:[%s818 + $0x30] sm:$0xe]
      %v872 = vld [vmem:[%s818 + $0x3c] sm:$0xe]
      %v873 = vld [vmem:[%s818 + $0x48] sm:$0xe]
      %v874 = vld [vmem:[%s818 + $0x54] sm:$0xe]
      %v875 = vld [vmem:[%s818 + $0x60] sm:$0xe]
      %v876 = vld [vmem:[%s818 + $0x6c] sm:$0xe]
      %v877 = vld [vmem:[%s818 + $0x78] sm:$0xe]
      %v878 = vld [vmem:[%s818 + $0x84] sm:$0xe]
      %v879 = vld [vmem:[%s818 + $0x90] sm:$0xe]
      %v880 = vld [vmem:[%s818 + $0x9c] sm:$0xe]
      %v881 = vld [vmem:[%s818 + $0xa8] sm:$0xe]
      %v882 = vld [vmem:[%s818 + $0xb4] sm:$0xe]
      %v915 = vunpack.c.l.b16 %v819
      %v916 = vunpack.c.l.b16 %v820
      %v917 = vunpack.c.l.b16 %v821
      %v918 = vunpack.c.l.b16 %v822
      %v919 = vunpack.c.l.b16 %v823
      %v920 = vunpack.c.l.b16 %v824
      %v921 = vunpack.c.l.b16 %v825
      %v922 = vunpack.c.l.b16 %v826
      %v923 = vunpack.c.l.b16 %v827
      %v924 = vunpack.c.l.b16 %v828
      %v925 = vunpack.c.l.b16 %v829
      %v926 = vunpack.c.l.b16 %v830
      %v927 = vunpack.c.l.b16 %v831
      %v928 = vunpack.c.l.b16 %v832
      %v929 = vunpack.c.l.b16 %v833
      %v930 = vunpack.c.l.b16 %v834
      %v931 = vunpack.c.l.b16 %v835
      %v932 = vunpack.c.l.b16 %v836
      %v933 = vunpack.c.l.b16 %v837
      %v934 = vunpack.c.l.b16 %v838
      %v935 = vunpack.c.l.b16 %v839
      %v936 = vunpack.c.l.b16 %v840
      %v937 = vunpack.c.l.b16 %v841
      %v938 = vunpack.c.l.b16 %v842
      %v939 = vunpack.c.l.b16 %v843
      %v940 = vunpack.c.l.b16 %v844
      %v941 = vunpack.c.l.b16 %v845
      %v942 = vunpack.c.l.b16 %v846
      %v943 = vunpack.c.l.b16 %v847
      %v944 = vunpack.c.l.b16 %v848
      %v945 = vunpack.c.l.b16 %v849
      %v946 = vunpack.c.l.b16 %v850
      %v947 = vpack.c.b16 %v916, %v915
      %v948 = vpack.c.b16 %v918, %v917
      %v949 = vpack.c.b16 %v920, %v919
      %v950 = vpack.c.b16 %v922, %v921
      %v951 = vpack.c.b16 %v924, %v923
      %v952 = vpack.c.b16 %v926, %v925
      %v953 = vpack.c.b16 %v928, %v927
      %v954 = vpack.c.b16 %v930, %v929
      %v955 = vpack.c.b16 %v932, %v931
      %v956 = vpack.c.b16 %v934, %v933
      %v957 = vpack.c.b16 %v936, %v935
      %v958 = vpack.c.b16 %v938, %v937
      %v959 = vpack.c.b16 %v940, %v939
      %v960 = vpack.c.b16 %v942, %v941
      %v961 = vpack.c.b16 %v944, %v943
      %v962 = vpack.c.b16 %v946, %v945
      %v979 = vunpack.c.l.b16 %v851
      %v980 = vunpack.c.l.b16 %v852
      %v981 = vunpack.c.l.b16 %v853
      %v982 = vunpack.c.l.b16 %v854
      %v983 = vunpack.c.l.b16 %v855
      %v984 = vunpack.c.l.b16 %v856
      %v985 = vunpack.c.l.b16 %v857
      %v986 = vunpack.c.l.b16 %v858
      %v987 = vunpack.c.l.b16 %v859
      %v988 = vunpack.c.l.b16 %v860
      %v989 = vunpack.c.l.b16 %v861
      %v990 = vunpack.c.l.b16 %v862
      %v991 = vunpack.c.l.b16 %v863
      %v992 = vunpack.c.l.b16 %v864
      %v993 = vunpack.c.l.b16 %v865
      %v994 = vunpack.c.l.b16 %v866
      %v995 = vpack.c.b16 %v979, %v979
      %v996 = vpack.c.b16 %v980, %v980
      %v997 = vpack.c.b16 %v981, %v981
      %v998 = vpack.c.b16 %v982, %v982
      %v999 = vpack.c.b16 %v983, %v983
      %v1000 = vpack.c.b16 %v984, %v984
      %v1001 = vpack.c.b16 %v985, %v985
      %v1002 = vpack.c.b16 %v986, %v986
      %v1003 = vpack.c.b16 %v987, %v987
      %v1004 = vpack.c.b16 %v988, %v988
      %v1005 = vpack.c.b16 %v989, %v989
      %v1006 = vpack.c.b16 %v990, %v990
      %v1007 = vpack.c.b16 %v991, %v991
      %v1008 = vpack.c.b16 %v992, %v992
      %v1009 = vpack.c.b16 %v993, %v993
      %v1010 = vpack.c.b16 %v994, %v994
      %v1012 = vshrl.u32 %v947, 16
      %v1014 = vshll.u32 %v947, 16
      %v1016 = vrot.slane %v1014, 1
      %v1017 = vor.u32 %v1012, %v1016
      %v1019 = vshll.u32 %v995, 16
      %v1021 = vrot.slane %v1019, 1
      %v1022 = vsel %vm393, %v1017, %v1021
      %v1024 = vshrl.u32 %v948, 16
      %v1026 = vshll.u32 %v948, 16
      %v1028 = vrot.slane %v1026, 1
      %v1029 = vor.u32 %v1024, %v1028
      %v1031 = vshll.u32 %v996, 16
      %v1033 = vrot.slane %v1031, 1
      %v1034 = vsel %vm393, %v1029, %v1033
      %v1036 = vshrl.u32 %v949, 16
      %v1038 = vshll.u32 %v949, 16
      %v1040 = vrot.slane %v1038, 1
      %v1041 = vor.u32 %v1036, %v1040
      %v1043 = vshll.u32 %v997, 16
      %v1045 = vrot.slane %v1043, 1
      %v1046 = vsel %vm393, %v1041, %v1045
      %v1048 = vshrl.u32 %v950, 16
      %v1050 = vshll.u32 %v950, 16
      %v1052 = vrot.slane %v1050, 1
      %v1053 = vor.u32 %v1048, %v1052
      %v1055 = vshll.u32 %v998, 16
      %v1057 = vrot.slane %v1055, 1
      %v1058 = vsel %vm393, %v1053, %v1057
      %v1060 = vshrl.u32 %v951, 16
      %v1062 = vshll.u32 %v951, 16
      %v1064 = vrot.slane %v1062, 1
      %v1065 = vor.u32 %v1060, %v1064
      %v1067 = vshll.u32 %v999, 16
      %v1069 = vrot.slane %v1067, 1
      %v1070 = vsel %vm393, %v1065, %v1069
      %v1072 = vshrl.u32 %v952, 16
      %v1074 = vshll.u32 %v952, 16
      %v1076 = vrot.slane %v1074, 1
      %v1077 = vor.u32 %v1072, %v1076
      %v1079 = vshll.u32 %v1000, 16
      %v1081 = vrot.slane %v1079, 1
      %v1082 = vsel %vm393, %v1077, %v1081
      %v1084 = vshrl.u32 %v953, 16
      %v1086 = vshll.u32 %v953, 16
      %v1088 = vrot.slane %v1086, 1
      %v1089 = vor.u32 %v1084, %v1088
      %v1091 = vshll.u32 %v1001, 16
      %v1093 = vrot.slane %v1091, 1
      %v1094 = vsel %vm393, %v1089, %v1093
      %v1096 = vshrl.u32 %v954, 16
      %v1098 = vshll.u32 %v954, 16
      %v1100 = vrot.slane %v1098, 1
      %v1101 = vor.u32 %v1096, %v1100
      %v1103 = vshll.u32 %v1002, 16
      %v1105 = vrot.slane %v1103, 1
      %v1106 = vsel %vm393, %v1101, %v1105
      %v1108 = vshrl.u32 %v955, 16
      %v1110 = vshll.u32 %v955, 16
      %v1112 = vrot.slane %v1110, 1
      %v1113 = vor.u32 %v1108, %v1112
      %v1115 = vshll.u32 %v1003, 16
      %v1117 = vrot.slane %v1115, 1
      %v1118 = vsel %vm393, %v1113, %v1117
      %v1120 = vshrl.u32 %v956, 16
      %v1122 = vshll.u32 %v956, 16
      %v1124 = vrot.slane %v1122, 1
      %v1125 = vor.u32 %v1120, %v1124
      %v1127 = vshll.u32 %v1004, 16
      %v1129 = vrot.slane %v1127, 1
      %v1130 = vsel %vm393, %v1125, %v1129
      %v1132 = vshrl.u32 %v957, 16
      %v1134 = vshll.u32 %v957, 16
      %v1136 = vrot.slane %v1134, 1
      %v1137 = vor.u32 %v1132, %v1136
      %v1139 = vshll.u32 %v1005, 16
      %v1141 = vrot.slane %v1139, 1
      %v1142 = vsel %vm393, %v1137, %v1141
      %v1144 = vshrl.u32 %v958, 16
      %v1146 = vshll.u32 %v958, 16
      %v1148 = vrot.slane %v1146, 1
      %v1149 = vor.u32 %v1144, %v1148
      %v1151 = vshll.u32 %v1006, 16
      %v1153 = vrot.slane %v1151, 1
      %v1154 = vsel %vm393, %v1149, %v1153
      %v1156 = vshrl.u32 %v959, 16
      %v1158 = vshll.u32 %v959, 16
      %v1160 = vrot.slane %v1158, 1
      %v1161 = vor.u32 %v1156, %v1160
      %v1163 = vshll.u32 %v1007, 16
      %v1165 = vrot.slane %v1163, 1
      %v1166 = vsel %vm393, %v1161, %v1165
      %v1168 = vshrl.u32 %v960, 16
      %v1170 = vshll.u32 %v960, 16
      %v1172 = vrot.slane %v1170, 1
      %v1173 = vor.u32 %v1168, %v1172
      %v1175 = vshll.u32 %v1008, 16
      %v1177 = vrot.slane %v1175, 1
      %v1178 = vsel %vm393, %v1173, %v1177
      %v1180 = vshrl.u32 %v961, 16
      %v1182 = vshll.u32 %v961, 16
      %v1184 = vrot.slane %v1182, 1
      %v1185 = vor.u32 %v1180, %v1184
      %v1187 = vshll.u32 %v1009, 16
      %v1189 = vrot.slane %v1187, 1
      %v1190 = vsel %vm393, %v1185, %v1189
      %v1192 = vshrl.u32 %v962, 16
      %v1194 = vshll.u32 %v962, 16
      %v1196 = vrot.slane %v1194, 1
      %v1197 = vor.u32 %v1192, %v1196
      %v1199 = vshll.u32 %v1010, 16
      %v1201 = vrot.slane %v1199, 1
      %v1202 = vsel %vm393, %v1197, %v1201
      %1203 = vrot.lane.b32.xlu0 %v1022, 4
      %v1204 = vpop.permute.xlu0 %1203
      %1205 = vrot.lane.b32.xlu0 %v1034, 4
      %v1206 = vpop.permute.xlu0 %1205
      %1207 = vrot.lane.b32.xlu0 %v1046, 4
      %v1208 = vpop.permute.xlu0 %1207
      %1209 = vrot.lane.b32.xlu0 %v1058, 4
      %v1210 = vpop.permute.xlu0 %1209
      %1211 = vrot.lane.b32.xlu0 %v1070, 4
      %v1212 = vpop.permute.xlu0 %1211
      %1213 = vrot.lane.b32.xlu0 %v1082, 4
      %v1214 = vpop.permute.xlu0 %1213
      %1215 = vrot.lane.b32.xlu0 %v1094, 4
      %v1216 = vpop.permute.xlu0 %1215
      %1217 = vrot.lane.b32.xlu0 %v1106, 4
      %v1218 = vpop.permute.xlu0 %1217
      %1219 = vrot.lane.b32.xlu0 %v1118, 4
      %v1220 = vpop.permute.xlu0 %1219
      %1221 = vrot.lane.b32.xlu0 %v1130, 4
      %v1222 = vpop.permute.xlu0 %1221
      %1223 = vrot.lane.b32.xlu0 %v1142, 4
      %v1224 = vpop.permute.xlu0 %1223
      %1225 = vrot.lane.b32.xlu0 %v1154, 4
      %v1226 = vpop.permute.xlu0 %1225
      %1227 = vrot.lane.b32.xlu0 %v1166, 4
      %v1228 = vpop.permute.xlu0 %1227
      %1229 = vrot.lane.b32.xlu0 %v1178, 4
      %v1230 = vpop.permute.xlu0 %1229
      %1231 = vrot.lane.b32.xlu0 %v1190, 4
      %v1232 = vpop.permute.xlu0 %1231
      %1233 = vrot.lane.b32.xlu0 %v1202, 4
      %v1234 = vpop.permute.xlu0 %1233
      %v1251 = vunpack.c.l.b16 %v867
      %v1252 = vunpack.c.l.b16 %v868
      %v1253 = vunpack.c.l.b16 %v869
      %v1254 = vunpack.c.l.b16 %v870
      %v1255 = vunpack.c.l.b16 %v871
      %v1256 = vunpack.c.l.b16 %v872
      %v1257 = vunpack.c.l.b16 %v873
      %v1258 = vunpack.c.l.b16 %v874
      %v1259 = vunpack.c.l.b16 %v875
      %v1260 = vunpack.c.l.b16 %v876
      %v1261 = vunpack.c.l.b16 %v877
      %v1262 = vunpack.c.l.b16 %v878
      %v1263 = vunpack.c.l.b16 %v879
      %v1264 = vunpack.c.l.b16 %v880
      %v1265 = vunpack.c.l.b16 %v881
      %v1266 = vunpack.c.l.b16 %v882
      %v1267 = vpack.c.b16 %v916, %v1251
      %v1268 = vpack.c.b16 %v918, %v1252
      %v1269 = vpack.c.b16 %v920, %v1253
      %v1270 = vpack.c.b16 %v922, %v1254
      %v1271 = vpack.c.b16 %v924, %v1255
      %v1272 = vpack.c.b16 %v926, %v1256
      %v1273 = vpack.c.b16 %v928, %v1257
      %v1274 = vpack.c.b16 %v930, %v1258
      %v1275 = vpack.c.b16 %v932, %v1259
      %v1276 = vpack.c.b16 %v934, %v1260
      %v1277 = vpack.c.b16 %v936, %v1261
      %v1278 = vpack.c.b16 %v938, %v1262
      %v1279 = vpack.c.b16 %v940, %v1263
      %v1280 = vpack.c.b16 %v942, %v1264
      %v1281 = vpack.c.b16 %v944, %v1265
      %v1282 = vpack.c.b16 %v946, %v1266
      %v1283 = vrot.slane %v1267, 1
      %v1284 = vrot.slane %v995, 1
      %v1285 = vsel %vm666, %v1283, %v1284
      %v1286 = vrot.slane %v1268, 1
      %v1287 = vrot.slane %v996, 1
      %v1288 = vsel %vm666, %v1286, %v1287
      %v1289 = vrot.slane %v1269, 1
      %v1290 = vrot.slane %v997, 1
      %v1291 = vsel %vm666, %v1289, %v1290
      %v1292 = vrot.slane %v1270, 1
      %v1293 = vrot.slane %v998, 1
      %v1294 = vsel %vm666, %v1292, %v1293
      %v1295 = vrot.slane %v1271, 1
      %v1296 = vrot.slane %v999, 1
      %v1297 = vsel %vm666, %v1295, %v1296
      %v1298 = vrot.slane %v1272, 1
      %v1299 = vrot.slane %v1000, 1
      %v1300 = vsel %vm666, %v1298, %v1299
      %v1301 = vrot.slane %v1273, 1
      %v1302 = vrot.slane %v1001, 1
      %v1303 = vsel %vm666, %v1301, %v1302
      %v1304 = vrot.slane %v1274, 1
      %v1305 = vrot.slane %v1002, 1
      %v1306 = vsel %vm666, %v1304, %v1305
      %v1307 = vrot.slane %v1275, 1
      %v1308 = vrot.slane %v1003, 1
      %v1309 = vsel %vm666, %v1307, %v1308
      %v1310 = vrot.slane %v1276, 1
      %v1311 = vrot.slane %v1004, 1
      %v1312 = vsel %vm666, %v1310, %v1311
      %v1313 = vrot.slane %v1277, 1
      %v1314 = vrot.slane %v1005, 1
      %v1315 = vsel %vm666, %v1313, %v1314
      %v1316 = vrot.slane %v1278, 1
      %v1317 = vrot.slane %v1006, 1
      %v1318 = vsel %vm666, %v1316, %v1317
      %v1319 = vrot.slane %v1279, 1
      %v1320 = vrot.slane %v1007, 1
      %v1321 = vsel %vm666, %v1319, %v1320
      %v1322 = vrot.slane %v1280, 1
      %v1323 = vrot.slane %v1008, 1
      %v1324 = vsel %vm666, %v1322, %v1323
      %v1325 = vrot.slane %v1281, 1
      %v1326 = vrot.slane %v1009, 1
      %v1327 = vsel %vm666, %v1325, %v1326
      %v1328 = vrot.slane %v1282, 1
      %v1329 = vrot.slane %v1010, 1
      %v1330 = vsel %vm666, %v1328, %v1329
      %1331 = vrot.lane.b32.xlu0 %v1285, 8
      %v1332 = vpop.permute.xlu0 %1331
      %1333 = vrot.lane.b32.xlu0 %v1288, 8
      %v1334 = vpop.permute.xlu0 %1333
      %1335 = vrot.lane.b32.xlu0 %v1291, 8
      %v1336 = vpop.permute.xlu0 %1335
      %1337 = vrot.lane.b32.xlu0 %v1294, 8
      %v1338 = vpop.permute.xlu0 %1337
      %1339 = vrot.lane.b32.xlu0 %v1297, 8
      %v1340 = vpop.permute.xlu0 %1339
      %1341 = vrot.lane.b32.xlu0 %v1300, 8
      %v1342 = vpop.permute.xlu0 %1341
      %1343 = vrot.lane.b32.xlu0 %v1303, 8
      %v1344 = vpop.permute.xlu0 %1343
      %1345 = vrot.lane.b32.xlu0 %v1306, 8
      %v1346 = vpop.permute.xlu0 %1345
      %1347 = vrot.lane.b32.xlu0 %v1309, 8
      %v1348 = vpop.permute.xlu0 %1347
      %1349 = vrot.lane.b32.xlu0 %v1312, 8
      %v1350 = vpop.permute.xlu0 %1349
      %1351 = vrot.lane.b32.xlu0 %v1315, 8
      %v1352 = vpop.permute.xlu0 %1351
      %1353 = vrot.lane.b32.xlu0 %v1318, 8
      %v1354 = vpop.permute.xlu0 %1353
      %1355 = vrot.lane.b32.xlu0 %v1321, 8
      %v1356 = vpop.permute.xlu0 %1355
      %1357 = vrot.lane.b32.xlu0 %v1324, 8
      %v1358 = vpop.permute.xlu0 %1357
      %1359 = vrot.lane.b32.xlu0 %v1327, 8
      %v1360 = vpop.permute.xlu0 %1359
      %1361 = vrot.lane.b32.xlu0 %v1330, 8
      %v1362 = vpop.permute.xlu0 %1361
      %v1364 = vsel %vm747, %v947, %v1204
      %v1366 = vsel %vm747, %v948, %v1206
      %v1368 = vsel %vm747, %v949, %v1208
      %v1370 = vsel %vm747, %v950, %v1210
      %v1372 = vsel %vm747, %v951, %v1212
      %v1374 = vsel %vm747, %v952, %v1214
      %v1376 = vsel %vm747, %v953, %v1216
      %v1378 = vsel %vm747, %v954, %v1218
      %v1380 = vsel %vm747, %v955, %v1220
      %v1382 = vsel %vm747, %v956, %v1222
      %v1384 = vsel %vm747, %v957, %v1224
      %v1386 = vsel %vm747, %v958, %v1226
      %v1388 = vsel %vm747, %v959, %v1228
      %v1390 = vsel %vm747, %v960, %v1230
      %v1392 = vsel %vm747, %v961, %v1232
      %v1394 = vsel %vm747, %v962, %v1234
      %v1396 = vsel %vm780, %v1364, %v1332
      %v1398 = vsel %vm780, %v1366, %v1334
      %v1400 = vsel %vm780, %v1368, %v1336
      %v1402 = vsel %vm780, %v1370, %v1338
      %v1404 = vsel %vm780, %v1372, %v1340
      %v1406 = vsel %vm780, %v1374, %v1342
      %v1408 = vsel %vm780, %v1376, %v1344
      %v1410 = vsel %vm780, %v1378, %v1346
      %v1412 = vsel %vm780, %v1380, %v1348
      %v1414 = vsel %vm780, %v1382, %v1350
      %v1416 = vsel %vm780, %v1384, %v1352
      %v1418 = vsel %vm780, %v1386, %v1354
      %v1420 = vsel %vm780, %v1388, %v1356
      %v1422 = vsel %vm780, %v1390, %v1358
      %v1424 = vsel %vm780, %v1392, %v1360
      %v1426 = vsel %vm780, %v1394, %v1362
      %s1427 = scalar_lea.vmem %s1, 8
      %v1428 = vld [vmem:[%s1427] sm:$0xf]
      %v1429 = vld [vmem:[%s1427 + $0x4] sm:$0x3]
      %v1432 = vunpack.c.l.b16 %v1428
      %v1433 = vunpack.c.l.b16 %v1429
      %v1434 = vpack.c.b16 %v1433, %v1432
      %vm1435 = vcmask 97280
      %v1436 = vsel %vm1435, %v1396, 0
      %v1438 = vsel %vm1435, %v1398, 0
      %v1440 = vsel %vm1435, %v1400, 0
      %v1442 = vsel %vm1435, %v1402, 0
      %v1444 = vsel %vm1435, %v1404, 0
      %v1446 = vsel %vm1435, %v1406, 0
      %v1448 = vsel %vm1435, %v1408, 0
      %v1450 = vsel %vm1435, %v1410, 0
      %v1452 = vsel %vm1435, %v1412, 0
      %v1454 = vsel %vm1435, %v1414, 0
      %v1456 = vsel %vm1435, %v1416, 0
      %v1458 = vsel %vm1435, %v1418, 0
      %v1460 = vsel %vm1435, %v1420, 0
      %v1462 = vsel %vm1435, %v1422, 0
      %v1464 = vsel %vm1435, %v1424, 0
      %v1466 = vsel %vm1435, %v1426, 0
      %vm1468 = vcmask 1045504
      %v1470 = vsel %vm1468, %v1434, 0
      %1472 = vmatprep.subr.bf16.mxu0 0
      %1473 = vmatpush1.bf16.msra.mxu0 0
      %1474 = vmatprep.subr.bf16.mxu0 0
      %1475 = vmatpush1.bf16.msra.mxu0 0
      %1476 = vmatprep.subr.bf16.mxu0 0
      %1477 = vmatpush1.bf16.msra.mxu0 0
      %1478 = vmatprep.subr.bf16.mxu0 0
      %1479 = vmatpush1.bf16.msra.mxu0 0
      %1480 = vmatprep.subr.bf16.mxu0 0
      %1481 = vmatpush1.bf16.msra.mxu0 0
      %1482 = vmatprep.subr.bf16.mxu0 0
      %1483 = vmatpush1.bf16.msra.mxu0 0
      %1484 = vmatprep.subr.bf16.mxu0 0
      %1485 = vmatpush1.bf16.msra.mxu0 0
      %1486 = vmatprep.subr.bf16.mxu0 0
      %1487 = vmatpush1.bf16.msra.mxu0 %v1470
      %1488 = vmatprep.subr.bf16.mxu0 0
      %1489 = vmatpush2.bf16.msra.mxu0 0
      %1490 = vmatprep.subr.bf16.mxu0 0
      %1491 = vmatpush2.bf16.msra.mxu0 0
      %1492 = vmatprep.subr.bf16.mxu0 0
      %1493 = vmatpush2.bf16.msra.mxu0 0
      %1494 = vmatprep.subr.bf16.mxu0 0
      %1495 = vmatpush2.bf16.msra.mxu0 0
      %1496 = vmatprep.subr.bf16.mxu0 0
      %1497 = vmatpush2.bf16.msra.mxu0 0
      %1498 = vmatprep.subr.bf16.mxu0 0
      %1499 = vmatpush2.bf16.msra.mxu0 0
      %1500 = vmatprep.subr.bf16.mxu0 0
      %1501 = vmatpush2.bf16.msra.mxu0 0
      %1502 = vmatprep.subr.bf16.mxu0 0
      %1503 = vmatpush2.bf16.msra.mxu0 0
      %1504 = vmatprep.mubr.bf16.mxu0 0
      %1505 = vmatmul.mubr.bf16.gmra.mxu0 %v1436
      %v1506 = vpop.f32.mrf.mxu0
      %v1507 = vadd.f32 0.0, %v1506
      %v1508 = vpop.f32.mrf.mxu0
      %v1509 = vpop.f32.mrf.mxu0
      %v1510 = vadd.f32 0.0, %v1509
      %v1511 = vpop.f32.mrf.mxu0
      %1512 = vmatprep.mubr.bf16.mxu0 0
      %1513 = vmatmul.mubr.bf16.gmra.mxu0 %v1438
      %v1514 = vpop.f32.mrf.mxu0
      %v1515 = vadd.f32 0.0, %v1514
      %v1516 = vpop.f32.mrf.mxu0
      %v1517 = vpop.f32.mrf.mxu0
      %v1518 = vadd.f32 0.0, %v1517
      %v1519 = vpop.f32.mrf.mxu0
      %1520 = vmatprep.mubr.bf16.mxu0 0
      %1521 = vmatmul.mubr.bf16.gmra.mxu0 %v1440
      %v1522 = vpop.f32.mrf.mxu0
      %v1523 = vadd.f32 0.0, %v1522
      %v1524 = vpop.f32.mrf.mxu0
      %v1525 = vpop.f32.mrf.mxu0
      %v1526 = vadd.f32 0.0, %v1525
      %v1527 = vpop.f32.mrf.mxu0
      %1528 = vmatprep.mubr.bf16.mxu0 0
      %1529 = vmatmul.mubr.bf16.gmra.mxu0 %v1442
      %v1530 = vpop.f32.mrf.mxu0
      %v1531 = vadd.f32 0.0, %v1530
      %v1532 = vpop.f32.mrf.mxu0
      %v1533 = vpop.f32.mrf.mxu0
      %v1534 = vadd.f32 0.0, %v1533
      %v1535 = vpop.f32.mrf.mxu0
      %1536 = vmatprep.mubr.bf16.mxu0 0
      %1537 = vmatmul.mubr.bf16.gmra.mxu0 %v1444
      %v1538 = vpop.f32.mrf.mxu0
      %v1539 = vadd.f32 0.0, %v1538
      %v1540 = vpop.f32.mrf.mxu0
      %v1541 = vpop.f32.mrf.mxu0
      %v1542 = vadd.f32 0.0, %v1541
      %v1543 = vpop.f32.mrf.mxu0
      %1544 = vmatprep.mubr.bf16.mxu0 0
      %1545 = vmatmul.mubr.bf16.gmra.mxu0 %v1446
      %v1546 = vpop.f32.mrf.mxu0
      %v1547 = vadd.f32 0.0, %v1546
      %v1548 = vpop.f32.mrf.mxu0
      %v1549 = vpop.f32.mrf.mxu0
      %v1550 = vadd.f32 0.0, %v1549
      %v1551 = vpop.f32.mrf.mxu0
      %1552 = vmatprep.mubr.bf16.mxu0 0
      %1553 = vmatmul.mubr.bf16.gmra.mxu0 %v1448
      %v1554 = vpop.f32.mrf.mxu0
      %v1555 = vadd.f32 0.0, %v1554
      %v1556 = vpop.f32.mrf.mxu0
      %v1557 = vpop.f32.mrf.mxu0
      %v1558 = vadd.f32 0.0, %v1557
      %v1559 = vpop.f32.mrf.mxu0
      %1560 = vmatprep.mubr.bf16.mxu0 0
      %1561 = vmatmul.mubr.bf16.gmra.mxu0 %v1450
      %v1562 = vpop.f32.mrf.mxu0
      %v1563 = vadd.f32 0.0, %v1562
      %v1564 = vpop.f32.mrf.mxu0
      %v1565 = vpop.f32.mrf.mxu0
      %v1566 = vadd.f32 0.0, %v1565
      %v1567 = vpop.f32.mrf.mxu0
      %1568 = vmatprep.mubr.bf16.mxu0 0
      %1569 = vmatmul.mubr.bf16.gmra.mxu0 %v1452
      %v1570 = vpop.f32.mrf.mxu0
      %v1571 = vadd.f32 0.0, %v1570
      %v1572 = vpop.f32.mrf.mxu0
      %v1573 = vpop.f32.mrf.mxu0
      %v1574 = vadd.f32 0.0, %v1573
      %v1575 = vpop.f32.mrf.mxu0
      %1576 = vmatprep.mubr.bf16.mxu0 0
      %1577 = vmatmul.mubr.bf16.gmra.mxu0 %v1454
      %v1578 = vpop.f32.mrf.mxu0
      %v1579 = vadd.f32 0.0, %v1578
      %v1580 = vpop.f32.mrf.mxu0
      %v1581 = vpop.f32.mrf.mxu0
      %v1582 = vadd.f32 0.0, %v1581
      %v1583 = vpop.f32.mrf.mxu0
      %1584 = vmatprep.mubr.bf16.mxu0 0
      %1585 = vmatmul.mubr.bf16.gmra.mxu0 %v1456
      %v1586 = vpop.f32.mrf.mxu0
      %v1587 = vadd.f32 0.0, %v1586
      %v1588 = vpop.f32.mrf.mxu0
      %v1589 = vpop.f32.mrf.mxu0
      %v1590 = vadd.f32 0.0, %v1589
      %v1591 = vpop.f32.mrf.mxu0
      %1592 = vmatprep.mubr.bf16.mxu0 0
      %1593 = vmatmul.mubr.bf16.gmra.mxu0 %v1458
      %v1594 = vpop.f32.mrf.mxu0
      %v1595 = vadd.f32 0.0, %v1594
      %v1596 = vpop.f32.mrf.mxu0
      %v1597 = vpop.f32.mrf.mxu0
      %v1598 = vadd.f32 0.0, %v1597
      %v1599 = vpop.f32.mrf.mxu0
      %1600 = vmatprep.mubr.bf16.mxu0 0
      %1601 = vmatmul.mubr.bf16.gmra.mxu0 %v1460
      %v1602 = vpop.f32.mrf.mxu0
      %v1603 = vadd.f32 0.0, %v1602
      %v1604 = vpop.f32.mrf.mxu0
      %v1605 = vpop.f32.mrf.mxu0
      %v1606 = vadd.f32 0.0, %v1605
      %v1607 = vpop.f32.mrf.mxu0
      %1608 = vmatprep.mubr.bf16.mxu0 0
      %1609 = vmatmul.mubr.bf16.gmra.mxu0 %v1462
      %v1610 = vpop.f32.mrf.mxu0
      %v1611 = vadd.f32 0.0, %v1610
      %v1612 = vpop.f32.mrf.mxu0
      %v1613 = vpop.f32.mrf.mxu0
      %v1614 = vadd.f32 0.0, %v1613
      %v1615 = vpop.f32.mrf.mxu0
      %1616 = vmatprep.mubr.bf16.mxu0 0
      %1617 = vmatmul.mubr.bf16.gmra.mxu0 %v1464
      %v1618 = vpop.f32.mrf.mxu0
      %v1619 = vadd.f32 0.0, %v1618
      %v1620 = vpop.f32.mrf.mxu0
      %v1621 = vpop.f32.mrf.mxu0
      %v1622 = vadd.f32 0.0, %v1621
      %v1623 = vpop.f32.mrf.mxu0
      %1624 = vmatprep.mubr.bf16.mxu0 0
      %1625 = vmatmul.mubr.bf16.gmra.mxu0 %v1466
      %v1626 = vpop.f32.mrf.mxu0
      %v1627 = vadd.f32 0.0, %v1626
      %v1628 = vpop.f32.mrf.mxu0
      %v1629 = vpop.f32.mrf.mxu0
      %v1630 = vadd.f32 0.0, %v1629
      %v1631 = vpop.f32.mrf.mxu0
      %1632 = vdwg.mxu0
      %v1635 = vunpack.c.l.b16 %v813
      %v1636 = vunpack.c.l.b16 %v814
      %v1637 = vpack.c.b16 %v1636, %v1635
      %v1638 = vsel %vm1435, %v782, 0
      %v1640 = vsel %vm1435, %v784, 0
      %v1642 = vsel %vm1435, %v786, 0
      %v1644 = vsel %vm1435, %v788, 0
      %v1646 = vsel %vm1435, %v790, 0
      %v1648 = vsel %vm1435, %v792, 0
      %v1650 = vsel %vm1435, %v794, 0
      %v1652 = vsel %vm1435, %v796, 0
      %v1654 = vsel %vm1435, %v798, 0
      %v1656 = vsel %vm1435, %v800, 0
      %v1658 = vsel %vm1435, %v802, 0
      %v1660 = vsel %vm1435, %v804, 0
      %v1662 = vsel %vm1435, %v806, 0
      %v1664 = vsel %vm1435, %v808, 0
      %v1666 = vsel %vm1435, %v810, 0
      %v1668 = vsel %vm1435, %v812, 0
      %v1671 = vsel %vm1468, %v1637, 0
      %1673 = vmatprep.subr.bf16.mxu0 0
      %1674 = vmatpush1.bf16.msra.mxu0 0
      %1675 = vmatprep.subr.bf16.mxu0 0
      %1676 = vmatpush1.bf16.msra.mxu0 0
      %1677 = vmatprep.subr.bf16.mxu0 0
      %1678 = vmatpush1.bf16.msra.mxu0 0
      %1679 = vmatprep.subr.bf16.mxu0 0
      %1680 = vmatpush1.bf16.msra.mxu0 0
      %1681 = vmatprep.subr.bf16.mxu0 0
      %1682 = vmatpush1.bf16.msra.mxu0 0
      %1683 = vmatprep.subr.bf16.mxu0 0
      %1684 = vmatpush1.bf16.msra.mxu0 0
      %1685 = vmatprep.subr.bf16.mxu0 0
      %1686 = vmatpush1.bf16.msra.mxu0 0
      %1687 = vmatprep.subr.bf16.mxu0 0
      %1688 = vmatpush1.bf16.msra.mxu0 %v1671
      %1689 = vmatprep.subr.bf16.mxu0 0
      %1690 = vmatpush2.bf16.msra.mxu0 0
      %1691 = vmatprep.subr.bf16.mxu0 0
      %1692 = vmatpush2.bf16.msra.mxu0 0
      %1693 = vmatprep.subr.bf16.mxu0 0
      %1694 = vmatpush2.bf16.msra.mxu0 0
      %1695 = vmatprep.subr.bf16.mxu0 0
      %1696 = vmatpush2.bf16.msra.mxu0 0
      %1697 = vmatprep.subr.bf16.mxu0 0
      %1698 = vmatpush2.bf16.msra.mxu0 0
      %1699 = vmatprep.subr.bf16.mxu0 0
      %1700 = vmatpush2.bf16.msra.mxu0 0
      %1701 = vmatprep.subr.bf16.mxu0 0
      %1702 = vmatpush2.bf16.msra.mxu0 0
      %1703 = vmatprep.subr.bf16.mxu0 0
      %1704 = vmatpush2.bf16.msra.mxu0 0
      %1705 = vmatprep.mubr.bf16.mxu0 0
      %1706 = vmatmul.mubr.bf16.gmra.mxu0 %v1638
      %v1707 = vpop.f32.mrf.mxu0
      %v1708 = vadd.f32 %v1507, %v1707
      %v1709 = vpop.f32.mrf.mxu0
      %v1710 = vpop.f32.mrf.mxu0
      %v1711 = vadd.f32 %v1510, %v1710
      %v1712 = vpop.f32.mrf.mxu0
      %1713 = vmatprep.mubr.bf16.mxu0 0
      %1714 = vmatmul.mubr.bf16.gmra.mxu0 %v1640
      %v1715 = vpop.f32.mrf.mxu0
      %v1716 = vadd.f32 %v1515, %v1715
      %v1717 = vpop.f32.mrf.mxu0
      %v1718 = vpop.f32.mrf.mxu0
      %v1719 = vadd.f32 %v1518, %v1718
      %v1720 = vpop.f32.mrf.mxu0
      %1721 = vmatprep.mubr.bf16.mxu0 0
      %1722 = vmatmul.mubr.bf16.gmra.mxu0 %v1642
      %v1723 = vpop.f32.mrf.mxu0
      %v1724 = vadd.f32 %v1523, %v1723
      %v1725 = vpop.f32.mrf.mxu0
      %v1726 = vpop.f32.mrf.mxu0
      %v1727 = vadd.f32 %v1526, %v1726
      %v1728 = vpop.f32.mrf.mxu0
      %1729 = vmatprep.mubr.bf16.mxu0 0
      %1730 = vmatmul.mubr.bf16.gmra.mxu0 %v1644
      %v1731 = vpop.f32.mrf.mxu0
      %v1732 = vadd.f32 %v1531, %v1731
      %v1733 = vpop.f32.mrf.mxu0
      %v1734 = vpop.f32.mrf.mxu0
      %v1735 = vadd.f32 %v1534, %v1734
      %v1736 = vpop.f32.mrf.mxu0
      %1737 = vmatprep.mubr.bf16.mxu0 0
      %1738 = vmatmul.mubr.bf16.gmra.mxu0 %v1646
      %v1739 = vpop.f32.mrf.mxu0
      %v1740 = vadd.f32 %v1539, %v1739
      %v1741 = vpop.f32.mrf.mxu0
      %v1742 = vpop.f32.mrf.mxu0
      %v1743 = vadd.f32 %v1542, %v1742
      %v1744 = vpop.f32.mrf.mxu0
      %1745 = vmatprep.mubr.bf16.mxu0 0
      %1746 = vmatmul.mubr.bf16.gmra.mxu0 %v1648
      %v1747 = vpop.f32.mrf.mxu0
      %v1748 = vadd.f32 %v1547, %v1747
      %v1749 = vpop.f32.mrf.mxu0
      %v1750 = vpop.f32.mrf.mxu0
      %v1751 = vadd.f32 %v1550, %v1750
      %v1752 = vpop.f32.mrf.mxu0
      %1753 = vmatprep.mubr.bf16.mxu0 0
      %1754 = vmatmul.mubr.bf16.gmra.mxu0 %v1650
      %v1755 = vpop.f32.mrf.mxu0
      %v1756 = vadd.f32 %v1555, %v1755
      %v1757 = vpop.f32.mrf.mxu0
      %v1758 = vpop.f32.mrf.mxu0
      %v1759 = vadd.f32 %v1558, %v1758
      %v1760 = vpop.f32.mrf.mxu0
      %1761 = vmatprep.mubr.bf16.mxu0 0
      %1762 = vmatmul.mubr.bf16.gmra.mxu0 %v1652
      %v1763 = vpop.f32.mrf.mxu0
      %v1764 = vadd.f32 %v1563, %v1763
      %v1765 = vpop.f32.mrf.mxu0
      %v1766 = vpop.f32.mrf.mxu0
      %v1767 = vadd.f32 %v1566, %v1766
      %v1768 = vpop.f32.mrf.mxu0
      %1769 = vmatprep.mubr.bf16.mxu0 0
      %1770 = vmatmul.mubr.bf16.gmra.mxu0 %v1654
      %v1771 = vpop.f32.mrf.mxu0
      %v1772 = vadd.f32 %v1571, %v1771
      %v1773 = vpop.f32.mrf.mxu0
      %v1774 = vpop.f32.mrf.mxu0
      %v1775 = vadd.f32 %v1574, %v1774
      %v1776 = vpop.f32.mrf.mxu0
      %1777 = vmatprep.mubr.bf16.mxu0 0
      %1778 = vmatmul.mubr.bf16.gmra.mxu0 %v1656
      %v1779 = vpop.f32.mrf.mxu0
      %v1780 = vadd.f32 %v1579, %v1779
      %v1781 = vpop.f32.mrf.mxu0
      %v1782 = vpop.f32.mrf.mxu0
      %v1783 = vadd.f32 %v1582, %v1782
      %v1784 = vpop.f32.mrf.mxu0
      %1785 = vmatprep.mubr.bf16.mxu0 0
      %1786 = vmatmul.mubr.bf16.gmra.mxu0 %v1658
      %v1787 = vpop.f32.mrf.mxu0
      %v1788 = vadd.f32 %v1587, %v1787
      %v1789 = vpop.f32.mrf.mxu0
      %v1790 = vpop.f32.mrf.mxu0
      %v1791 = vadd.f32 %v1590, %v1790
      %v1792 = vpop.f32.mrf.mxu0
      %1793 = vmatprep.mubr.bf16.mxu0 0
      %1794 = vmatmul.mubr.bf16.gmra.mxu0 %v1660
      %v1795 = vpop.f32.mrf.mxu0
      %v1796 = vadd.f32 %v1595, %v1795
      %v1797 = vpop.f32.mrf.mxu0
      %v1798 = vpop.f32.mrf.mxu0
      %v1799 = vadd.f32 %v1598, %v1798
      %v1800 = vpop.f32.mrf.mxu0
      %1801 = vmatprep.mubr.bf16.mxu0 0
      %1802 = vmatmul.mubr.bf16.gmra.mxu0 %v1662
      %v1803 = vpop.f32.mrf.mxu0
      %v1804 = vadd.f32 %v1603, %v1803
      %v1805 = vpop.f32.mrf.mxu0
      %v1806 = vpop.f32.mrf.mxu0
      %v1807 = vadd.f32 %v1606, %v1806
      %v1808 = vpop.f32.mrf.mxu0
      %1809 = vmatprep.mubr.bf16.mxu0 0
      %1810 = vmatmul.mubr.bf16.gmra.mxu0 %v1664
      %v1811 = vpop.f32.mrf.mxu0
      %v1812 = vadd.f32 %v1611, %v1811
      %v1813 = vpop.f32.mrf.mxu0
      %v1814 = vpop.f32.mrf.mxu0
      %v1815 = vadd.f32 %v1614, %v1814
      %v1816 = vpop.f32.mrf.mxu0
      %1817 = vmatprep.mubr.bf16.mxu0 0
      %1818 = vmatmul.mubr.bf16.gmra.mxu0 %v1666
      %v1819 = vpop.f32.mrf.mxu0
      %v1820 = vadd.f32 %v1619, %v1819
      %v1821 = vpop.f32.mrf.mxu0
      %v1822 = vpop.f32.mrf.mxu0
      %v1823 = vadd.f32 %v1622, %v1822
      %v1824 = vpop.f32.mrf.mxu0
      %1825 = vmatprep.mubr.bf16.mxu0 0
      %1826 = vmatmul.mubr.bf16.gmra.mxu0 %v1668
      %v1827 = vpop.f32.mrf.mxu0
      %v1828 = vadd.f32 %v1627, %v1827
      %v1829 = vpop.f32.mrf.mxu0
      %v1830 = vpop.f32.mrf.mxu0
      %v1831 = vadd.f32 %v1630, %v1830
      %v1832 = vpop.f32.mrf.mxu0
      %1833 = vdwg.mxu0
      %s1834 = sadd.s32 %s197, 2
      %s1835 = smul.u32 %s1834, 3
      %s1836 = smul.addr %s1835, 4
      %s1837 = scalar_lea.vmem %s184, %s1836
      %v1838 = vld [vmem:[%s1837] sm:$0xf]
      %v1839 = vld [vmem:[%s1837 + $0x4] sm:$0xf]
      %v1840 = vld [vmem:[%s1837 + $0xc] sm:$0xf]
      %v1841 = vld [vmem:[%s1837 + $0x10] sm:$0xf]
      %v1842 = vld [vmem:[%s1837 + $0x18] sm:$0xf]
      %v1843 = vld [vmem:[%s1837 + $0x1c] sm:$0xf]
      %v1844 = vld [vmem:[%s1837 + $0x24] sm:$0xf]
      %v1845 = vld [vmem:[%s1837 + $0x28] sm:$0xf]
      %v1846 = vld [vmem:[%s1837 + $0x30] sm:$0xf]
      %v1847 = vld [vmem:[%s1837 + $0x34] sm:$0xf]
      %v1848 = vld [vmem:[%s1837 + $0x3c] sm:$0xf]
      %v1849 = vld [vmem:[%s1837 + $0x40] sm:$0xf]
      %v1850 = vld [vmem:[%s1837 + $0x48] sm:$0xf]
      %v1851 = vld [vmem:[%s1837 + $0x4c] sm:$0xf]
      %v1852 = vld [vmem:[%s1837 + $0x54] sm:$0xf]
      %v1853 = vld [vmem:[%s1837 + $0x58] sm:$0xf]
      %v1854 = vld [vmem:[%s1837 + $0x60] sm:$0xf]
      %v1855 = vld [vmem:[%s1837 + $0x64] sm:$0xf]
      %v1856 = vld [vmem:[%s1837 + $0x6c] sm:$0xf]
      %v1857 = vld [vmem:[%s1837 + $0x70] sm:$0xf]
      %v1858 = vld [vmem:[%s1837 + $0x78] sm:$0xf]
      %v1859 = vld [vmem:[%s1837 + $0x7c] sm:$0xf]
      %v1860 = vld [vmem:[%s1837 + $0x84] sm:$0xf]
      %v1861 = vld [vmem:[%s1837 + $0x88] sm:$0xf]
      %v1862 = vld [vmem:[%s1837 + $0x90] sm:$0xf]
      %v1863 = vld [vmem:[%s1837 + $0x94] sm:$0xf]
      %v1864 = vld [vmem:[%s1837 + $0x9c] sm:$0xf]
      %v1865 = vld [vmem:[%s1837 + $0xa0] sm:$0xf]
      %v1866 = vld [vmem:[%s1837 + $0xa8] sm:$0xf]
      %v1867 = vld [vmem:[%s1837 + $0xac] sm:$0xf]
      %v1868 = vld [vmem:[%s1837 + $0xb4] sm:$0xf]
      %v1869 = vld [vmem:[%s1837 + $0xb8] sm:$0xf]
      %v1870 = vld [vmem:[%s1837 + $0x8] sm:$0x1]
      %v1871 = vld [vmem:[%s1837 + $0x14] sm:$0x1]
      %v1872 = vld [vmem:[%s1837 + $0x20] sm:$0x1]
      %v1873 = vld [vmem:[%s1837 + $0x2c] sm:$0x1]
      %v1874 = vld [vmem:[%s1837 + $0x38] sm:$0x1]
      %v1875 = vld [vmem:[%s1837 + $0x44] sm:$0x1]
      %v1876 = vld [vmem:[%s1837 + $0x50] sm:$0x1]
      %v1877 = vld [vmem:[%s1837 + $0x5c] sm:$0x1]
      %v1878 = vld [vmem:[%s1837 + $0x68] sm:$0x1]
      %v1879 = vld [vmem:[%s1837 + $0x74] sm:$0x1]
      %v1880 = vld [vmem:[%s1837 + $0x80] sm:$0x1]
      %v1881 = vld [vmem:[%s1837 + $0x8c] sm:$0x1]
      %v1882 = vld [vmem:[%s1837 + $0x98] sm:$0x1]
      %v1883 = vld [vmem:[%s1837 + $0xa4] sm:$0x1]
      %v1884 = vld [vmem:[%s1837 + $0xb0] sm:$0x1]
      %v1885 = vld [vmem:[%s1837 + $0xbc] sm:$0x1]
      %v1886 = vld [vmem:[%s1837] sm:$0xe]
      %v1887 = vld [vmem:[%s1837 + $0xc] sm:$0xe]
      %v1888 = vld [vmem:[%s1837 + $0x18] sm:$0xe]
      %v1889 = vld [vmem:[%s1837 + $0x24] sm:$0xe]
      %v1890 = vld [vmem:[%s1837 + $0x30] sm:$0xe]
      %v1891 = vld [vmem:[%s1837 + $0x3c] sm:$0xe]
      %v1892 = vld [vmem:[%s1837 + $0x48] sm:$0xe]
      %v1893 = vld [vmem:[%s1837 + $0x54] sm:$0xe]
      %v1894 = vld [vmem:[%s1837 + $0x60] sm:$0xe]
      %v1895 = vld [vmem:[%s1837 + $0x6c] sm:$0xe]
      %v1896 = vld [vmem:[%s1837 + $0x78] sm:$0xe]
      %v1897 = vld [vmem:[%s1837 + $0x84] sm:$0xe]
      %v1898 = vld [vmem:[%s1837 + $0x90] sm:$0xe]
      %v1899 = vld [vmem:[%s1837 + $0x9c] sm:$0xe]
      %v1900 = vld [vmem:[%s1837 + $0xa8] sm:$0xe]
      %v1901 = vld [vmem:[%s1837 + $0xb4] sm:$0xe]
      %v1934 = vunpack.c.l.b16 %v1838
      %v1935 = vunpack.c.l.b16 %v1839
      %v1936 = vunpack.c.l.b16 %v1840
      %v1937 = vunpack.c.l.b16 %v1841
      %v1938 = vunpack.c.l.b16 %v1842
      %v1939 = vunpack.c.l.b16 %v1843
      %v1940 = vunpack.c.l.b16 %v1844
      %v1941 = vunpack.c.l.b16 %v1845
      %v1942 = vunpack.c.l.b16 %v1846
      %v1943 = vunpack.c.l.b16 %v1847
      %v1944 = vunpack.c.l.b16 %v1848
      %v1945 = vunpack.c.l.b16 %v1849
      %v1946 = vunpack.c.l.b16 %v1850
      %v1947 = vunpack.c.l.b16 %v1851
      %v1948 = vunpack.c.l.b16 %v1852
      %v1949 = vunpack.c.l.b16 %v1853
      %v1950 = vunpack.c.l.b16 %v1854
      %v1951 = vunpack.c.l.b16 %v1855
      %v1952 = vunpack.c.l.b16 %v1856
      %v1953 = vunpack.c.l.b16 %v1857
      %v1954 = vunpack.c.l.b16 %v1858
      %v1955 = vunpack.c.l.b16 %v1859
      %v1956 = vunpack.c.l.b16 %v1860
      %v1957 = vunpack.c.l.b16 %v1861
      %v1958 = vunpack.c.l.b16 %v1862
      %v1959 = vunpack.c.l.b16 %v1863
      %v1960 = vunpack.c.l.b16 %v1864
      %v1961 = vunpack.c.l.b16 %v1865
      %v1962 = vunpack.c.l.b16 %v1866
      %v1963 = vunpack.c.l.b16 %v1867
      %v1964 = vunpack.c.l.b16 %v1868
      %v1965 = vunpack.c.l.b16 %v1869
      %v1966 = vpack.c.b16 %v1935, %v1934
      %v1967 = vpack.c.b16 %v1937, %v1936
      %v1968 = vpack.c.b16 %v1939, %v1938
      %v1969 = vpack.c.b16 %v1941, %v1940
      %v1970 = vpack.c.b16 %v1943, %v1942
      %v1971 = vpack.c.b16 %v1945, %v1944
      %v1972 = vpack.c.b16 %v1947, %v1946
      %v1973 = vpack.c.b16 %v1949, %v1948
      %v1974 = vpack.c.b16 %v1951, %v1950
      %v1975 = vpack.c.b16 %v1953, %v1952
      %v1976 = vpack.c.b16 %v1955, %v1954
      %v1977 = vpack.c.b16 %v1957, %v1956
      %v1978 = vpack.c.b16 %v1959, %v1958
      %v1979 = vpack.c.b16 %v1961, %v1960
      %v1980 = vpack.c.b16 %v1963, %v1962
      %v1981 = vpack.c.b16 %v1965, %v1964
      %v1998 = vunpack.c.l.b16 %v1870
      %v1999 = vunpack.c.l.b16 %v1871
      %v2000 = vunpack.c.l.b16 %v1872
      %v2001 = vunpack.c.l.b16 %v1873
      %v2002 = vunpack.c.l.b16 %v1874
      %v2003 = vunpack.c.l.b16 %v1875
      %v2004 = vunpack.c.l.b16 %v1876
      %v2005 = vunpack.c.l.b16 %v1877
      %v2006 = vunpack.c.l.b16 %v1878
      %v2007 = vunpack.c.l.b16 %v1879
      %v2008 = vunpack.c.l.b16 %v1880
      %v2009 = vunpack.c.l.b16 %v1881
      %v2010 = vunpack.c.l.b16 %v1882
      %v2011 = vunpack.c.l.b16 %v1883
      %v2012 = vunpack.c.l.b16 %v1884
      %v2013 = vunpack.c.l.b16 %v1885
      %v2014 = vpack.c.b16 %v1998, %v1998
      %v2015 = vpack.c.b16 %v1999, %v1999
      %v2016 = vpack.c.b16 %v2000, %v2000
      %v2017 = vpack.c.b16 %v2001, %v2001
      %v2018 = vpack.c.b16 %v2002, %v2002
      %v2019 = vpack.c.b16 %v2003, %v2003
      %v2020 = vpack.c.b16 %v2004, %v2004
      %v2021 = vpack.c.b16 %v2005, %v2005
      %v2022 = vpack.c.b16 %v2006, %v2006
      %v2023 = vpack.c.b16 %v2007, %v2007
      %v2024 = vpack.c.b16 %v2008, %v2008
      %v2025 = vpack.c.b16 %v2009, %v2009
      %v2026 = vpack.c.b16 %v2010, %v2010
      %v2027 = vpack.c.b16 %v2011, %v2011
      %v2028 = vpack.c.b16 %v2012, %v2012
      %v2029 = vpack.c.b16 %v2013, %v2013
      %v2031 = vshrl.u32 %v1966, 16
      %v2033 = vshll.u32 %v1966, 16
      %v2035 = vrot.slane %v2033, 1
      %v2036 = vor.u32 %v2031, %v2035
      %v2038 = vshll.u32 %v2014, 16
      %v2040 = vrot.slane %v2038, 1
      %v2041 = vsel %vm393, %v2036, %v2040
      %v2043 = vshrl.u32 %v1967, 16
      %v2045 = vshll.u32 %v1967, 16
      %v2047 = vrot.slane %v2045, 1
      %v2048 = vor.u32 %v2043, %v2047
      %v2050 = vshll.u32 %v2015, 16
      %v2052 = vrot.slane %v2050, 1
      %v2053 = vsel %vm393, %v2048, %v2052
      %v2055 = vshrl.u32 %v1968, 16
      %v2057 = vshll.u32 %v1968, 16
      %v2059 = vrot.slane %v2057, 1
      %v2060 = vor.u32 %v2055, %v2059
      %v2062 = vshll.u32 %v2016, 16
      %v2064 = vrot.slane %v2062, 1
      %v2065 = vsel %vm393, %v2060, %v2064
      %v2067 = vshrl.u32 %v1969, 16
      %v2069 = vshll.u32 %v1969, 16
      %v2071 = vrot.slane %v2069, 1
      %v2072 = vor.u32 %v2067, %v2071
      %v2074 = vshll.u32 %v2017, 16
      %v2076 = vrot.slane %v2074, 1
      %v2077 = vsel %vm393, %v2072, %v2076
      %v2079 = vshrl.u32 %v1970, 16
      %v2081 = vshll.u32 %v1970, 16
      %v2083 = vrot.slane %v2081, 1
      %v2084 = vor.u32 %v2079, %v2083
      %v2086 = vshll.u32 %v2018, 16
      %v2088 = vrot.slane %v2086, 1
      %v2089 = vsel %vm393, %v2084, %v2088
      %v2091 = vshrl.u32 %v1971, 16
      %v2093 = vshll.u32 %v1971, 16
      %v2095 = vrot.slane %v2093, 1
      %v2096 = vor.u32 %v2091, %v2095
      %v2098 = vshll.u32 %v2019, 16
      %v2100 = vrot.slane %v2098, 1
      %v2101 = vsel %vm393, %v2096, %v2100
      %v2103 = vshrl.u32 %v1972, 16
      %v2105 = vshll.u32 %v1972, 16
      %v2107 = vrot.slane %v2105, 1
      %v2108 = vor.u32 %v2103, %v2107
      %v2110 = vshll.u32 %v2020, 16
      %v2112 = vrot.slane %v2110, 1
      %v2113 = vsel %vm393, %v2108, %v2112
      %v2115 = vshrl.u32 %v1973, 16
      %v2117 = vshll.u32 %v1973, 16
      %v2119 = vrot.slane %v2117, 1
      %v2120 = vor.u32 %v2115, %v2119
      %v2122 = vshll.u32 %v2021, 16
      %v2124 = vrot.slane %v2122, 1
      %v2125 = vsel %vm393, %v2120, %v2124
      %v2127 = vshrl.u32 %v1974, 16
      %v2129 = vshll.u32 %v1974, 16
      %v2131 = vrot.slane %v2129, 1
      %v2132 = vor.u32 %v2127, %v2131
      %v2134 = vshll.u32 %v2022, 16
      %v2136 = vrot.slane %v2134, 1
      %v2137 = vsel %vm393, %v2132, %v2136
      %v2139 = vshrl.u32 %v1975, 16
      %v2141 = vshll.u32 %v1975, 16
      %v2143 = vrot.slane %v2141, 1
      %v2144 = vor.u32 %v2139, %v2143
      %v2146 = vshll.u32 %v2023, 16
      %v2148 = vrot.slane %v2146, 1
      %v2149 = vsel %vm393, %v2144, %v2148
      %v2151 = vshrl.u32 %v1976, 16
      %v2153 = vshll.u32 %v1976, 16
      %v2155 = vrot.slane %v2153, 1
      %v2156 = vor.u32 %v2151, %v2155
      %v2158 = vshll.u32 %v2024, 16
      %v2160 = vrot.slane %v2158, 1
      %v2161 = vsel %vm393, %v2156, %v2160
      %v2163 = vshrl.u32 %v1977, 16
      %v2165 = vshll.u32 %v1977, 16
      %v2167 = vrot.slane %v2165, 1
      %v2168 = vor.u32 %v2163, %v2167
      %v2170 = vshll.u32 %v2025, 16
      %v2172 = vrot.slane %v2170, 1
      %v2173 = vsel %vm393, %v2168, %v2172
      %v2175 = vshrl.u32 %v1978, 16
      %v2177 = vshll.u32 %v1978, 16
      %v2179 = vrot.slane %v2177, 1
      %v2180 = vor.u32 %v2175, %v2179
      %v2182 = vshll.u32 %v2026, 16
      %v2184 = vrot.slane %v2182, 1
      %v2185 = vsel %vm393, %v2180, %v2184
      %v2187 = vshrl.u32 %v1979, 16
      %v2189 = vshll.u32 %v1979, 16
      %v2191 = vrot.slane %v2189, 1
      %v2192 = vor.u32 %v2187, %v2191
      %v2194 = vshll.u32 %v2027, 16
      %v2196 = vrot.slane %v2194, 1
      %v2197 = vsel %vm393, %v2192, %v2196
      %v2199 = vshrl.u32 %v1980, 16
      %v2201 = vshll.u32 %v1980, 16
      %v2203 = vrot.slane %v2201, 1
      %v2204 = vor.u32 %v2199, %v2203
      %v2206 = vshll.u32 %v2028, 16
      %v2208 = vrot.slane %v2206, 1
      %v2209 = vsel %vm393, %v2204, %v2208
      %v2211 = vshrl.u32 %v1981, 16
      %v2213 = vshll.u32 %v1981, 16
      %v2215 = vrot.slane %v2213, 1
      %v2216 = vor.u32 %v2211, %v2215
      %v2218 = vshll.u32 %v2029, 16
      %v2220 = vrot.slane %v2218, 1
      %v2221 = vsel %vm393, %v2216, %v2220
      %2222 = vrot.lane.b32.xlu0 %v2041, 4
      %v2223 = vpop.permute.xlu0 %2222
      %2224 = vrot.lane.b32.xlu0 %v2053, 4
      %v2225 = vpop.permute.xlu0 %2224
      %2226 = vrot.lane.b32.xlu0 %v2065, 4
      %v2227 = vpop.permute.xlu0 %2226
      %2228 = vrot.lane.b32.xlu0 %v2077, 4
      %v2229 = vpop.permute.xlu0 %2228
      %2230 = vrot.lane.b32.xlu0 %v2089, 4
      %v2231 = vpop.permute.xlu0 %2230
      %2232 = vrot.lane.b32.xlu0 %v2101, 4
      %v2233 = vpop.permute.xlu0 %2232
      %2234 = vrot.lane.b32.xlu0 %v2113, 4
      %v2235 = vpop.permute.xlu0 %2234
      %2236 = vrot.lane.b32.xlu0 %v2125, 4
      %v2237 = vpop.permute.xlu0 %2236
      %2238 = vrot.lane.b32.xlu0 %v2137, 4
      %v2239 = vpop.permute.xlu0 %2238
      %2240 = vrot.lane.b32.xlu0 %v2149, 4
      %v2241 = vpop.permute.xlu0 %2240
      %2242 = vrot.lane.b32.xlu0 %v2161, 4
      %v2243 = vpop.permute.xlu0 %2242
      %2244 = vrot.lane.b32.xlu0 %v2173, 4
      %v2245 = vpop.permute.xlu0 %2244
      %2246 = vrot.lane.b32.xlu0 %v2185, 4
      %v2247 = vpop.permute.xlu0 %2246
      %2248 = vrot.lane.b32.xlu0 %v2197, 4
      %v2249 = vpop.permute.xlu0 %2248
      %2250 = vrot.lane.b32.xlu0 %v2209, 4
      %v2251 = vpop.permute.xlu0 %2250
      %2252 = vrot.lane.b32.xlu0 %v2221, 4
      %v2253 = vpop.permute.xlu0 %2252
      %v2270 = vunpack.c.l.b16 %v1886
      %v2271 = vunpack.c.l.b16 %v1887
      %v2272 = vunpack.c.l.b16 %v1888
      %v2273 = vunpack.c.l.b16 %v1889
      %v2274 = vunpack.c.l.b16 %v1890
      %v2275 = vunpack.c.l.b16 %v1891
      %v2276 = vunpack.c.l.b16 %v1892
      %v2277 = vunpack.c.l.b16 %v1893
      %v2278 = vunpack.c.l.b16 %v1894
      %v2279 = vunpack.c.l.b16 %v1895
      %v2280 = vunpack.c.l.b16 %v1896
      %v2281 = vunpack.c.l.b16 %v1897
      %v2282 = vunpack.c.l.b16 %v1898
      %v2283 = vunpack.c.l.b16 %v1899
      %v2284 = vunpack.c.l.b16 %v1900
      %v2285 = vunpack.c.l.b16 %v1901
      %v2286 = vpack.c.b16 %v1935, %v2270
      %v2287 = vpack.c.b16 %v1937, %v2271
      %v2288 = vpack.c.b16 %v1939, %v2272
      %v2289 = vpack.c.b16 %v1941, %v2273
      %v2290 = vpack.c.b16 %v1943, %v2274
      %v2291 = vpack.c.b16 %v1945, %v2275
      %v2292 = vpack.c.b16 %v1947, %v2276
      %v2293 = vpack.c.b16 %v1949, %v2277
      %v2294 = vpack.c.b16 %v1951, %v2278
      %v2295 = vpack.c.b16 %v1953, %v2279
      %v2296 = vpack.c.b16 %v1955, %v2280
      %v2297 = vpack.c.b16 %v1957, %v2281
      %v2298 = vpack.c.b16 %v1959, %v2282
      %v2299 = vpack.c.b16 %v1961, %v2283
      %v2300 = vpack.c.b16 %v1963, %v2284
      %v2301 = vpack.c.b16 %v1965, %v2285
      %v2302 = vrot.slane %v2286, 1
      %v2303 = vrot.slane %v2014, 1
      %v2304 = vsel %vm666, %v2302, %v2303
      %v2305 = vrot.slane %v2287, 1
      %v2306 = vrot.slane %v2015, 1
      %v2307 = vsel %vm666, %v2305, %v2306
      %v2308 = vrot.slane %v2288, 1
      %v2309 = vrot.slane %v2016, 1
      %v2310 = vsel %vm666, %v2308, %v2309
      %v2311 = vrot.slane %v2289, 1
      %v2312 = vrot.slane %v2017, 1
      %v2313 = vsel %vm666, %v2311, %v2312
      %v2314 = vrot.slane %v2290, 1
      %v2315 = vrot.slane %v2018, 1
      %v2316 = vsel %vm666, %v2314, %v2315
      %v2317 = vrot.slane %v2291, 1
      %v2318 = vrot.slane %v2019, 1
      %v2319 = vsel %vm666, %v2317, %v2318
      %v2320 = vrot.slane %v2292, 1
      %v2321 = vrot.slane %v2020, 1
      %v2322 = vsel %vm666, %v2320, %v2321
      %v2323 = vrot.slane %v2293, 1
      %v2324 = vrot.slane %v2021, 1
      %v2325 = vsel %vm666, %v2323, %v2324
      %v2326 = vrot.slane %v2294, 1
      %v2327 = vrot.slane %v2022, 1
      %v2328 = vsel %vm666, %v2326, %v2327
      %v2329 = vrot.slane %v2295, 1
      %v2330 = vrot.slane %v2023, 1
      %v2331 = vsel %vm666, %v2329, %v2330
      %v2332 = vrot.slane %v2296, 1
      %v2333 = vrot.slane %v2024, 1
      %v2334 = vsel %vm666, %v2332, %v2333
      %v2335 = vrot.slane %v2297, 1
      %v2336 = vrot.slane %v2025, 1
      %v2337 = vsel %vm666, %v2335, %v2336
      %v2338 = vrot.slane %v2298, 1
      %v2339 = vrot.slane %v2026, 1
      %v2340 = vsel %vm666, %v2338, %v2339
      %v2341 = vrot.slane %v2299, 1
      %v2342 = vrot.slane %v2027, 1
      %v2343 = vsel %vm666, %v2341, %v2342
      %v2344 = vrot.slane %v2300, 1
      %v2345 = vrot.slane %v2028, 1
      %v2346 = vsel %vm666, %v2344, %v2345
      %v2347 = vrot.slane %v2301, 1
      %v2348 = vrot.slane %v2029, 1
      %v2349 = vsel %vm666, %v2347, %v2348
      %2350 = vrot.lane.b32.xlu0 %v2304, 8
      %v2351 = vpop.permute.xlu0 %2350
      %2352 = vrot.lane.b32.xlu0 %v2307, 8
      %v2353 = vpop.permute.xlu0 %2352
      %2354 = vrot.lane.b32.xlu0 %v2310, 8
      %v2355 = vpop.permute.xlu0 %2354
      %2356 = vrot.lane.b32.xlu0 %v2313, 8
      %v2357 = vpop.permute.xlu0 %2356
      %2358 = vrot.lane.b32.xlu0 %v2316, 8
      %v2359 = vpop.permute.xlu0 %2358
      %2360 = vrot.lane.b32.xlu0 %v2319, 8
      %v2361 = vpop.permute.xlu0 %2360
      %2362 = vrot.lane.b32.xlu0 %v2322, 8
      %v2363 = vpop.permute.xlu0 %2362
      %2364 = vrot.lane.b32.xlu0 %v2325, 8
      %v2365 = vpop.permute.xlu0 %2364
      %2366 = vrot.lane.b32.xlu0 %v2328, 8
      %v2367 = vpop.permute.xlu0 %2366
      %2368 = vrot.lane.b32.xlu0 %v2331, 8
      %v2369 = vpop.permute.xlu0 %2368
      %2370 = vrot.lane.b32.xlu0 %v2334, 8
      %v2371 = vpop.permute.xlu0 %2370
      %2372 = vrot.lane.b32.xlu0 %v2337, 8
      %v2373 = vpop.permute.xlu0 %2372
      %2374 = vrot.lane.b32.xlu0 %v2340, 8
      %v2375 = vpop.permute.xlu0 %2374
      %2376 = vrot.lane.b32.xlu0 %v2343, 8
      %v2377 = vpop.permute.xlu0 %2376
      %2378 = vrot.lane.b32.xlu0 %v2346, 8
      %v2379 = vpop.permute.xlu0 %2378
      %2380 = vrot.lane.b32.xlu0 %v2349, 8
      %v2381 = vpop.permute.xlu0 %2380
      %v2383 = vsel %vm747, %v1966, %v2223
      %v2385 = vsel %vm747, %v1967, %v2225
      %v2387 = vsel %vm747, %v1968, %v2227
      %v2389 = vsel %vm747, %v1969, %v2229
      %v2391 = vsel %vm747, %v1970, %v2231
      %v2393 = vsel %vm747, %v1971, %v2233
      %v2395 = vsel %vm747, %v1972, %v2235
      %v2397 = vsel %vm747, %v1973, %v2237
      %v2399 = vsel %vm747, %v1974, %v2239
      %v2401 = vsel %vm747, %v1975, %v2241
      %v2403 = vsel %vm747, %v1976, %v2243
      %v2405 = vsel %vm747, %v1977, %v2245
      %v2407 = vsel %vm747, %v1978, %v2247
      %v2409 = vsel %vm747, %v1979, %v2249
      %v2411 = vsel %vm747, %v1980, %v2251
      %v2413 = vsel %vm747, %v1981, %v2253
      %v2415 = vsel %vm780, %v2383, %v2351
      %v2417 = vsel %vm780, %v2385, %v2353
      %v2419 = vsel %vm780, %v2387, %v2355
      %v2421 = vsel %vm780, %v2389, %v2357
      %v2423 = vsel %vm780, %v2391, %v2359
      %v2425 = vsel %vm780, %v2393, %v2361
      %v2427 = vsel %vm780, %v2395, %v2363
      %v2429 = vsel %vm780, %v2397, %v2365
      %v2431 = vsel %vm780, %v2399, %v2367
      %v2433 = vsel %vm780, %v2401, %v2369
      %v2435 = vsel %vm780, %v2403, %v2371
      %v2437 = vsel %vm780, %v2405, %v2373
      %v2439 = vsel %vm780, %v2407, %v2375
      %v2441 = vsel %vm780, %v2409, %v2377
      %v2443 = vsel %vm780, %v2411, %v2379
      %v2445 = vsel %vm780, %v2413, %v2381
      %s2446 = scalar_lea.vmem %s1, 16
      %v2447 = vld [vmem:[%s2446] sm:$0xf]
      %v2448 = vld [vmem:[%s2446 + $0x4] sm:$0x3]
      %v2451 = vunpack.c.l.b16 %v2447
      %v2452 = vunpack.c.l.b16 %v2448
      %v2453 = vpack.c.b16 %v2452, %v2451
      %v2454 = vsel %vm1435, %v2415, 0
      %v2456 = vsel %vm1435, %v2417, 0
      %v2458 = vsel %vm1435, %v2419, 0
      %v2460 = vsel %vm1435, %v2421, 0
      %v2462 = vsel %vm1435, %v2423, 0
      %v2464 = vsel %vm1435, %v2425, 0
      %v2466 = vsel %vm1435, %v2427, 0
      %v2468 = vsel %vm1435, %v2429, 0
      %v2470 = vsel %vm1435, %v2431, 0
      %v2472 = vsel %vm1435, %v2433, 0
      %v2474 = vsel %vm1435, %v2435, 0
      %v2476 = vsel %vm1435, %v2437, 0
      %v2478 = vsel %vm1435, %v2439, 0
      %v2480 = vsel %vm1435, %v2441, 0
      %v2482 = vsel %vm1435, %v2443, 0
      %v2484 = vsel %vm1435, %v2445, 0
      %v2487 = vsel %vm1468, %v2453, 0
      %2489 = vmatprep.subr.bf16.mxu0 0
      %2490 = vmatpush1.bf16.msra.mxu0 0
      %2491 = vmatprep.subr.bf16.mxu0 0
      %2492 = vmatpush1.bf16.msra.mxu0 0
      %2493 = vmatprep.subr.bf16.mxu0 0
      %2494 = vmatpush1.bf16.msra.mxu0 0
      %2495 = vmatprep.subr.bf16.mxu0 0
      %2496 = vmatpush1.bf16.msra.mxu0 0
      %2497 = vmatprep.subr.bf16.mxu0 0
      %2498 = vmatpush1.bf16.msra.mxu0 0
      %2499 = vmatprep.subr.bf16.mxu0 0
      %2500 = vmatpush1.bf16.msra.mxu0 0
      %2501 = vmatprep.subr.bf16.mxu0 0
      %2502 = vmatpush1.bf16.msra.mxu0 0
      %2503 = vmatprep.subr.bf16.mxu0 0
      %2504 = vmatpush1.bf16.msra.mxu0 %v2487
      %2505 = vmatprep.subr.bf16.mxu0 0
      %2506 = vmatpush2.bf16.msra.mxu0 0
      %2507 = vmatprep.subr.bf16.mxu0 0
      %2508 = vmatpush2.bf16.msra.mxu0 0
      %2509 = vmatprep.subr.bf16.mxu0 0
      %2510 = vmatpush2.bf16.msra.mxu0 0
      %2511 = vmatprep.subr.bf16.mxu0 0
      %2512 = vmatpush2.bf16.msra.mxu0 0
      %2513 = vmatprep.subr.bf16.mxu0 0
      %2514 = vmatpush2.bf16.msra.mxu0 0
      %2515 = vmatprep.subr.bf16.mxu0 0
      %2516 = vmatpush2.bf16.msra.mxu0 0
      %2517 = vmatprep.subr.bf16.mxu0 0
      %2518 = vmatpush2.bf16.msra.mxu0 0
      %2519 = vmatprep.subr.bf16.mxu0 0
      %2520 = vmatpush2.bf16.msra.mxu0 0
      %2521 = vmatprep.mubr.bf16.mxu0 0
      %2522 = vmatmul.mubr.bf16.gmra.mxu0 %v2454
      %v2523 = vpop.f32.mrf.mxu0
      %v2524 = vadd.f32 0.0, %v2523
      %v2525 = vpop.f32.mrf.mxu0
      %v2526 = vpop.f32.mrf.mxu0
      %v2527 = vadd.f32 0.0, %v2526
      %v2528 = vpop.f32.mrf.mxu0
      %2529 = vmatprep.mubr.bf16.mxu0 0
      %2530 = vmatmul.mubr.bf16.gmra.mxu0 %v2456
      %v2531 = vpop.f32.mrf.mxu0
      %v2532 = vadd.f32 0.0, %v2531
      %v2533 = vpop.f32.mrf.mxu0
      %v2534 = vpop.f32.mrf.mxu0
      %v2535 = vadd.f32 0.0, %v2534
      %v2536 = vpop.f32.mrf.mxu0
      %2537 = vmatprep.mubr.bf16.mxu0 0
      %2538 = vmatmul.mubr.bf16.gmra.mxu0 %v2458
      %v2539 = vpop.f32.mrf.mxu0
      %v2540 = vadd.f32 0.0, %v2539
      %v2541 = vpop.f32.mrf.mxu0
      %v2542 = vpop.f32.mrf.mxu0
      %v2543 = vadd.f32 0.0, %v2542
      %v2544 = vpop.f32.mrf.mxu0
      %2545 = vmatprep.mubr.bf16.mxu0 0
      %2546 = vmatmul.mubr.bf16.gmra.mxu0 %v2460
      %v2547 = vpop.f32.mrf.mxu0
      %v2548 = vadd.f32 0.0, %v2547
      %v2549 = vpop.f32.mrf.mxu0
      %v2550 = vpop.f32.mrf.mxu0
      %v2551 = vadd.f32 0.0, %v2550
      %v2552 = vpop.f32.mrf.mxu0
      %2553 = vmatprep.mubr.bf16.mxu0 0
      %2554 = vmatmul.mubr.bf16.gmra.mxu0 %v2462
      %v2555 = vpop.f32.mrf.mxu0
      %v2556 = vadd.f32 0.0, %v2555
      %v2557 = vpop.f32.mrf.mxu0
      %v2558 = vpop.f32.mrf.mxu0
      %v2559 = vadd.f32 0.0, %v2558
      %v2560 = vpop.f32.mrf.mxu0
      %2561 = vmatprep.mubr.bf16.mxu0 0
      %2562 = vmatmul.mubr.bf16.gmra.mxu0 %v2464
      %v2563 = vpop.f32.mrf.mxu0
      %v2564 = vadd.f32 0.0, %v2563
      %v2565 = vpop.f32.mrf.mxu0
      %v2566 = vpop.f32.mrf.mxu0
      %v2567 = vadd.f32 0.0, %v2566
      %v2568 = vpop.f32.mrf.mxu0
      %2569 = vmatprep.mubr.bf16.mxu0 0
      %2570 = vmatmul.mubr.bf16.gmra.mxu0 %v2466
      %v2571 = vpop.f32.mrf.mxu0
      %v2572 = vadd.f32 0.0, %v2571
      %v2573 = vpop.f32.mrf.mxu0
      %v2574 = vpop.f32.mrf.mxu0
      %v2575 = vadd.f32 0.0, %v2574
      %v2576 = vpop.f32.mrf.mxu0
      %2577 = vmatprep.mubr.bf16.mxu0 0
      %2578 = vmatmul.mubr.bf16.gmra.mxu0 %v2468
      %v2579 = vpop.f32.mrf.mxu0
      %v2580 = vadd.f32 0.0, %v2579
      %v2581 = vpop.f32.mrf.mxu0
      %v2582 = vpop.f32.mrf.mxu0
      %v2583 = vadd.f32 0.0, %v2582
      %v2584 = vpop.f32.mrf.mxu0
      %2585 = vmatprep.mubr.bf16.mxu0 0
      %2586 = vmatmul.mubr.bf16.gmra.mxu0 %v2470
      %v2587 = vpop.f32.mrf.mxu0
      %v2588 = vadd.f32 0.0, %v2587
      %v2589 = vpop.f32.mrf.mxu0
      %v2590 = vpop.f32.mrf.mxu0
      %v2591 = vadd.f32 0.0, %v2590
      %v2592 = vpop.f32.mrf.mxu0
      %2593 = vmatprep.mubr.bf16.mxu0 0
      %2594 = vmatmul.mubr.bf16.gmra.mxu0 %v2472
      %v2595 = vpop.f32.mrf.mxu0
      %v2596 = vadd.f32 0.0, %v2595
      %v2597 = vpop.f32.mrf.mxu0
      %v2598 = vpop.f32.mrf.mxu0
      %v2599 = vadd.f32 0.0, %v2598
      %v2600 = vpop.f32.mrf.mxu0
      %2601 = vmatprep.mubr.bf16.mxu0 0
      %2602 = vmatmul.mubr.bf16.gmra.mxu0 %v2474
      %v2603 = vpop.f32.mrf.mxu0
      %v2604 = vadd.f32 0.0, %v2603
      %v2605 = vpop.f32.mrf.mxu0
      %v2606 = vpop.f32.mrf.mxu0
      %v2607 = vadd.f32 0.0, %v2606
      %v2608 = vpop.f32.mrf.mxu0
      %2609 = vmatprep.mubr.bf16.mxu0 0
      %2610 = vmatmul.mubr.bf16.gmra.mxu0 %v2476
      %v2611 = vpop.f32.mrf.mxu0
      %v2612 = vadd.f32 0.0, %v2611
      %v2613 = vpop.f32.mrf.mxu0
      %v2614 = vpop.f32.mrf.mxu0
      %v2615 = vadd.f32 0.0, %v2614
      %v2616 = vpop.f32.mrf.mxu0
      %2617 = vmatprep.mubr.bf16.mxu0 0
      %2618 = vmatmul.mubr.bf16.gmra.mxu0 %v2478
      %v2619 = vpop.f32.mrf.mxu0
      %v2620 = vadd.f32 0.0, %v2619
      %v2621 = vpop.f32.mrf.mxu0
      %v2622 = vpop.f32.mrf.mxu0
      %v2623 = vadd.f32 0.0, %v2622
      %v2624 = vpop.f32.mrf.mxu0
      %2625 = vmatprep.mubr.bf16.mxu0 0
      %2626 = vmatmul.mubr.bf16.gmra.mxu0 %v2480
      %v2627 = vpop.f32.mrf.mxu0
      %v2628 = vadd.f32 0.0, %v2627
      %v2629 = vpop.f32.mrf.mxu0
      %v2630 = vpop.f32.mrf.mxu0
      %v2631 = vadd.f32 0.0, %v2630
      %v2632 = vpop.f32.mrf.mxu0
      %2633 = vmatprep.mubr.bf16.mxu0 0
      %2634 = vmatmul.mubr.bf16.gmra.mxu0 %v2482
      %v2635 = vpop.f32.mrf.mxu0
      %v2636 = vadd.f32 0.0, %v2635
      %v2637 = vpop.f32.mrf.mxu0
      %v2638 = vpop.f32.mrf.mxu0
      %v2639 = vadd.f32 0.0, %v2638
      %v2640 = vpop.f32.mrf.mxu0
      %2641 = vmatprep.mubr.bf16.mxu0 0
      %2642 = vmatmul.mubr.bf16.gmra.mxu0 %v2484
      %v2643 = vpop.f32.mrf.mxu0
      %v2644 = vadd.f32 0.0, %v2643
      %v2645 = vpop.f32.mrf.mxu0
      %v2646 = vpop.f32.mrf.mxu0
      %v2647 = vadd.f32 0.0, %v2646
      %v2648 = vpop.f32.mrf.mxu0
      %2649 = vdwg.mxu0
      %v2650 = vadd.f32 %v1708, %v2524
      %v2651 = vadd.f32 %v1711, %v2527
      %v2652 = vadd.f32 %v1716, %v2532
      %v2653 = vadd.f32 %v1719, %v2535
      %v2654 = vadd.f32 %v1724, %v2540
      %v2655 = vadd.f32 %v1727, %v2543
      %v2656 = vadd.f32 %v1732, %v2548
      %v2657 = vadd.f32 %v1735, %v2551
      %v2658 = vadd.f32 %v1740, %v2556
      %v2659 = vadd.f32 %v1743, %v2559
      %v2660 = vadd.f32 %v1748, %v2564
      %v2661 = vadd.f32 %v1751, %v2567
      %v2662 = vadd.f32 %v1756, %v2572
      %v2663 = vadd.f32 %v1759, %v2575
      %v2664 = vadd.f32 %v1764, %v2580
      %v2665 = vadd.f32 %v1767, %v2583
      %v2666 = vadd.f32 %v1772, %v2588
      %v2667 = vadd.f32 %v1775, %v2591
      %v2668 = vadd.f32 %v1780, %v2596
      %v2669 = vadd.f32 %v1783, %v2599
      %v2670 = vadd.f32 %v1788, %v2604
      %v2671 = vadd.f32 %v1791, %v2607
      %v2672 = vadd.f32 %v1796, %v2612
      %v2673 = vadd.f32 %v1799, %v2615
      %v2674 = vadd.f32 %v1804, %v2620
      %v2675 = vadd.f32 %v1807, %v2623
      %v2676 = vadd.f32 %v1812, %v2628
      %v2677 = vadd.f32 %v1815, %v2631
      %v2678 = vadd.f32 %v1820, %v2636
      %v2679 = vadd.f32 %v1823, %v2639
      %v2680 = vadd.f32 %v1828, %v2644
      %v2681 = vadd.f32 %v1831, %v2647
      %v2682 = vld [vmem:[%s2] sm:$0x1]
      %v2684 = vlaneseq
      %v2685 = vshrl.u32 %v2684, 7
      %v2686 = vsub.s32 0, %v2685
      %v2687 = vrot.slane %v2682, %v2686
      %v2689 = vadd.f32 %v2650, %v2687
      %v2690 = vadd.f32 %v2651, %v2687
      %v2691 = vadd.f32 %v2652, %v2687
      %v2692 = vadd.f32 %v2653, %v2687
      %v2693 = vadd.f32 %v2654, %v2687
      %v2694 = vadd.f32 %v2655, %v2687
      %v2695 = vadd.f32 %v2656, %v2687
      %v2696 = vadd.f32 %v2657, %v2687
      %v2697 = vadd.f32 %v2658, %v2687
      %v2698 = vadd.f32 %v2659, %v2687
      %v2699 = vadd.f32 %v2660, %v2687
      %v2700 = vadd.f32 %v2661, %v2687
      %v2701 = vadd.f32 %v2662, %v2687
      %v2702 = vadd.f32 %v2663, %v2687
      %v2703 = vadd.f32 %v2664, %v2687
      %v2704 = vadd.f32 %v2665, %v2687
      %v2705 = vadd.f32 %v2666, %v2687
      %v2706 = vadd.f32 %v2667, %v2687
      %v2707 = vadd.f32 %v2668, %v2687
      %v2708 = vadd.f32 %v2669, %v2687
      %v2709 = vadd.f32 %v2670, %v2687
      %v2710 = vadd.f32 %v2671, %v2687
      %v2711 = vadd.f32 %v2672, %v2687
      %v2712 = vadd.f32 %v2673, %v2687
      %v2713 = vadd.f32 %v2674, %v2687
      %v2714 = vadd.f32 %v2675, %v2687
      %v2715 = vadd.f32 %v2676, %v2687
      %v2716 = vadd.f32 %v2677, %v2687
      %v2717 = vadd.f32 %v2678, %v2687
      %v2718 = vadd.f32 %v2679, %v2687
      %v2719 = vadd.f32 %v2680, %v2687
      %v2720 = vadd.f32 %v2681, %v2687
      %v2721 = vmax.f32 %v2689, 0.0
      %v2722 = vmax.f32 %v2690, 0.0
      %v2723 = vmax.f32 %v2691, 0.0
      %v2724 = vmax.f32 %v2692, 0.0
      %v2725 = vmax.f32 %v2693, 0.0
      %v2726 = vmax.f32 %v2694, 0.0
      %v2727 = vmax.f32 %v2695, 0.0
      %v2728 = vmax.f32 %v2696, 0.0
      %v2729 = vmax.f32 %v2697, 0.0
      %v2730 = vmax.f32 %v2698, 0.0
      %v2731 = vmax.f32 %v2699, 0.0
      %v2732 = vmax.f32 %v2700, 0.0
      %v2733 = vmax.f32 %v2701, 0.0
      %v2734 = vmax.f32 %v2702, 0.0
      %v2735 = vmax.f32 %v2703, 0.0
      %v2736 = vmax.f32 %v2704, 0.0
      %v2737 = vmax.f32 %v2705, 0.0
      %v2738 = vmax.f32 %v2706, 0.0
      %v2739 = vmax.f32 %v2707, 0.0
      %v2740 = vmax.f32 %v2708, 0.0
      %v2741 = vmax.f32 %v2709, 0.0
      %v2742 = vmax.f32 %v2710, 0.0
      %v2743 = vmax.f32 %v2711, 0.0
      %v2744 = vmax.f32 %v2712, 0.0
      %v2745 = vmax.f32 %v2713, 0.0
      %v2746 = vmax.f32 %v2714, 0.0
      %v2747 = vmax.f32 %v2715, 0.0
      %v2748 = vmax.f32 %v2716, 0.0
      %v2749 = vmax.f32 %v2717, 0.0
      %v2750 = vmax.f32 %v2718, 0.0
      %v2751 = vmax.f32 %v2719, 0.0
      %v2752 = vmax.f32 %v2720, 0.0
      %v2753 = vpack.c.bf16 %v2722, %v2721
      %v2754 = vpack.c.bf16 %v2724, %v2723
      %v2755 = vpack.c.bf16 %v2726, %v2725
      %v2756 = vpack.c.bf16 %v2728, %v2727
      %v2757 = vpack.c.bf16 %v2730, %v2729
      %v2758 = vpack.c.bf16 %v2732, %v2731
      %v2759 = vpack.c.bf16 %v2734, %v2733
      %v2760 = vpack.c.bf16 %v2736, %v2735
      %v2761 = vpack.c.bf16 %v2738, %v2737
      %v2762 = vpack.c.bf16 %v2740, %v2739
      %v2763 = vpack.c.bf16 %v2742, %v2741
      %v2764 = vpack.c.bf16 %v2744, %v2743
      %v2765 = vpack.c.bf16 %v2746, %v2745
      %v2766 = vpack.c.bf16 %v2748, %v2747
      %v2767 = vpack.c.bf16 %v2750, %v2749
      %v2768 = vpack.c.bf16 %v2752, %v2751
      %v2785 = vunpack.c.l.b16 %v2753
      %v2786 = vunpack.c.h.b16 %v2753
      %v2787 = vunpack.c.l.b16 %v2754
      %v2788 = vunpack.c.h.b16 %v2754
      %v2789 = vunpack.c.l.b16 %v2755
      %v2790 = vunpack.c.h.b16 %v2755
      %v2791 = vunpack.c.l.b16 %v2756
      %v2792 = vunpack.c.h.b16 %v2756
      %v2793 = vunpack.c.l.b16 %v2757
      %v2794 = vunpack.c.h.b16 %v2757
      %v2795 = vunpack.c.l.b16 %v2758
      %v2796 = vunpack.c.h.b16 %v2758
      %v2797 = vunpack.c.l.b16 %v2759
      %v2798 = vunpack.c.h.b16 %v2759
      %v2799 = vunpack.c.l.b16 %v2760
      %v2800 = vunpack.c.h.b16 %v2760
      %v2801 = vunpack.c.l.b16 %v2761
      %v2802 = vunpack.c.h.b16 %v2761
      %v2803 = vunpack.c.l.b16 %v2762
      %v2804 = vunpack.c.h.b16 %v2762
      %v2805 = vunpack.c.l.b16 %v2763
      %v2806 = vunpack.c.h.b16 %v2763
      %v2807 = vunpack.c.l.b16 %v2764
      %v2808 = vunpack.c.h.b16 %v2764
      %v2809 = vunpack.c.l.b16 %v2765
      %v2810 = vunpack.c.h.b16 %v2765
      %v2811 = vunpack.c.l.b16 %v2766
      %v2812 = vunpack.c.h.b16 %v2766
      %v2813 = vunpack.c.l.b16 %v2767
      %v2814 = vunpack.c.h.b16 %v2767
      %v2815 = vunpack.c.l.b16 %v2768
      %v2816 = vunpack.c.h.b16 %v2768
      %v2817 = vpack.c.b16 %v2785, %v2785
      %v2818 = vpack.c.b16 %v2786, %v2786
      %v2819 = vpack.c.b16 %v2787, %v2787
      %v2820 = vpack.c.b16 %v2788, %v2788
      %v2821 = vpack.c.b16 %v2789, %v2789
      %v2822 = vpack.c.b16 %v2790, %v2790
      %v2823 = vpack.c.b16 %v2791, %v2791
      %v2824 = vpack.c.b16 %v2792, %v2792
      %v2825 = vpack.c.b16 %v2793, %v2793
      %v2826 = vpack.c.b16 %v2794, %v2794
      %v2827 = vpack.c.b16 %v2795, %v2795
      %v2828 = vpack.c.b16 %v2796, %v2796
      %v2829 = vpack.c.b16 %v2797, %v2797
      %v2830 = vpack.c.b16 %v2798, %v2798
      %v2831 = vpack.c.b16 %v2799, %v2799
      %v2832 = vpack.c.b16 %v2800, %v2800
      %v2833 = vpack.c.b16 %v2801, %v2801
      %v2834 = vpack.c.b16 %v2802, %v2802
      %v2835 = vpack.c.b16 %v2803, %v2803
      %v2836 = vpack.c.b16 %v2804, %v2804
      %v2837 = vpack.c.b16 %v2805, %v2805
      %v2838 = vpack.c.b16 %v2806, %v2806
      %v2839 = vpack.c.b16 %v2807, %v2807
      %v2840 = vpack.c.b16 %v2808, %v2808
      %v2841 = vpack.c.b16 %v2809, %v2809
      %v2842 = vpack.c.b16 %v2810, %v2810
      %v2843 = vpack.c.b16 %v2811, %v2811
      %v2844 = vpack.c.b16 %v2812, %v2812
      %v2845 = vpack.c.b16 %v2813, %v2813
      %v2846 = vpack.c.b16 %v2814, %v2814
      %v2847 = vpack.c.b16 %v2815, %v2815
      %v2848 = vpack.c.b16 %v2816, %v2816
      %vm2881 = vcmask 60416
      %2882 = vst.msk [vmem:[%s194] sm:$0xf] %vm2881, %v2817
      %2883 = vst.msk [vmem:[%s194 + $0x4] sm:$0xf] %vm2881, %v2818
      %2884 = vst.msk [vmem:[%s194 + $0x8] sm:$0xf] %vm2881, %v2819
      %2885 = vst.msk [vmem:[%s194 + $0xc] sm:$0xf] %vm2881, %v2820
      %2886 = vst.msk [vmem:[%s194 + $0x10] sm:$0xf] %vm2881, %v2821
      %2887 = vst.msk [vmem:[%s194 + $0x14] sm:$0xf] %vm2881, %v2822
      %2888 = vst.msk [vmem:[%s194 + $0x18] sm:$0xf] %vm2881, %v2823
      %2889 = vst.msk [vmem:[%s194 + $0x1c] sm:$0xf] %vm2881, %v2824
      %2890 = vst.msk [vmem:[%s194 + $0x20] sm:$0xf] %vm2881, %v2825
      %2891 = vst.msk [vmem:[%s194 + $0x24] sm:$0xf] %vm2881, %v2826
      %2892 = vst.msk [vmem:[%s194 + $0x28] sm:$0xf] %vm2881, %v2827
      %2893 = vst.msk [vmem:[%s194 + $0x2c] sm:$0xf] %vm2881, %v2828
      %2894 = vst.msk [vmem:[%s194 + $0x30] sm:$0xf] %vm2881, %v2829
      %2895 = vst.msk [vmem:[%s194 + $0x34] sm:$0xf] %vm2881, %v2830
      %2896 = vst.msk [vmem:[%s194 + $0x38] sm:$0xf] %vm2881, %v2831
      %2897 = vst.msk [vmem:[%s194 + $0x3c] sm:$0xf] %vm2881, %v2832
      %2898 = vst.msk [vmem:[%s194 + $0x40] sm:$0xf] %vm2881, %v2833
      %2899 = vst.msk [vmem:[%s194 + $0x44] sm:$0xf] %vm2881, %v2834
      %2900 = vst.msk [vmem:[%s194 + $0x48] sm:$0xf] %vm2881, %v2835
      %2901 = vst.msk [vmem:[%s194 + $0x4c] sm:$0xf] %vm2881, %v2836
      %2902 = vst.msk [vmem:[%s194 + $0x50] sm:$0xf] %vm2881, %v2837
      %2903 = vst.msk [vmem:[%s194 + $0x54] sm:$0xf] %vm2881, %v2838
      %2904 = vst.msk [vmem:[%s194 + $0x58] sm:$0xf] %vm2881, %v2839
      %2905 = vst.msk [vmem:[%s194 + $0x5c] sm:$0xf] %vm2881, %v2840
      %2906 = vst.msk [vmem:[%s194 + $0x60] sm:$0xf] %vm2881, %v2841
      %2907 = vst.msk [vmem:[%s194 + $0x64] sm:$0xf] %vm2881, %v2842
      %2908 = vst.msk [vmem:[%s194 + $0x68] sm:$0xf] %vm2881, %v2843
      %2909 = vst.msk [vmem:[%s194 + $0x6c] sm:$0xf] %vm2881, %v2844
      %2910 = vst.msk [vmem:[%s194 + $0x70] sm:$0xf] %vm2881, %v2845
      %2911 = vst.msk [vmem:[%s194 + $0x74] sm:$0xf] %vm2881, %v2846
      %2912 = vst.msk [vmem:[%s194 + $0x78] sm:$0xf] %vm2881, %v2847
      %2913 = vst.msk [vmem:[%s194 + $0x7c] sm:$0xf] %vm2881, %v2848
      %s2914 = smul.u32 16, %s19
      %p2915 = scmp.lt.s32.totalorder %s18, 1
      %s2916 = scalar_select %p2915, %s18, 1
      %p2917 = scmp.lt.s32.totalorder %s2914, 15
      %s2918 = scalar_select %p2917, %s2914, 15
      %s2919 = smul.addr %s2918, 2
      %s2920 = smul.addr %s2916, 32
      %s2921 = sadd.s32 %s2919, %s2920
      %s2922 = smul.addr %s2921, 4
      %s2923 = scalar_lea.vmem %s3, %s2922
      // Predicated region
      $region33: #{conv_bn_relu_forward.1} parent=31 // pred_check
        %p2924 = pneg %p114
      $region34: #{conv_bn_relu_forward.1} parent=31 // pred_check_branch
        %2926 = sbr.rel (%p2924) target = $region36
      $region35: #{conv_bn_relu_forward.1} parent=31 // pred_region
        %s2927 = smul.u32 16, %s19
      $region36: #{conv_bn_relu_forward.1} parent=31 // pred_fallthru
        _
    $region32: #{conv_bn_relu_forward.1} parent=5 // pred_fallthru
      _
    %p2928 = scmp.le.s32.totalorder 2, %s9
    // Predicated region
    $region37: #{conv_bn_relu_forward.1} parent=5 // pred_check
      %p2929 = pneg %p2928
    $region38: #{conv_bn_relu_forward.1} parent=5 // pred_check_branch
      %2931 = sbr.rel (%p2929) target = $region40
    $region39: #{conv_bn_relu_forward.1} parent=5 // pred_region
      %s2932 = ssub.s32 %s9, 2
      // Predicated region
      $region41: #{conv_bn_relu_forward.1} parent=39 // pred_check
        %p2933 = pneg %p120
      $region42: #{conv_bn_relu_forward.1} parent=39 // pred_check_branch
        %2935 = sbr.rel (%p2933) target = $region44
      $region43: #{conv_bn_relu_forward.1} parent=39 // pred_region
        %s2936 = smul.u32 16, %s21
        %p2937 = scmp.lt.s32.totalorder %s20, 1
        %s2938 = scalar_select %p2937, %s20, 1
        %p2939 = scmp.lt.s32.totalorder %s2936, 15
        %s2940 = scalar_select %p2939, %s2936, 15
        %s2941 = smul.addr %s2940, 2
        %s2942 = smul.addr %s2938, 32
        %s2943 = sadd.s32 %s2941, %s2942
        %s2944 = smul.addr %s2943, 4
        %s2945 = scalar_lea.vmem %s3, %s2944
      $region44: #{conv_bn_relu_forward.1} parent=39 // pred_fallthru
        _
    $region40: #{conv_bn_relu_forward.1} parent=5 // pred_fallthru
      _
  $region6: #{conv_bn_relu_forward.1} parent=0 // loop_footer
    %s13 = sadd.s32 1, %s9
  $region7: #{conv_bn_relu_forward.1} parent=0 // loop_footer_branch
    %8 = sbr.rel target = $region3
  $region8: #{conv_bn_relu_forward.1} parent=0 // loop_exit
    _

</llo_original>
